<compile_context>
chip_gen: v5e
topology: v5e:2x2
jax: 0.10.0
libtpu: 0.0.40
codegen_flags: <defaults>
</compile_context>

<pallas_src>
import jax
import jax.numpy as jnp
from jax import lax
from jax.experimental import pallas as pl
from jax.experimental.pallas import tpu as pltpu
import numpy as np


# ---------------------------------------------------------------------------
# Fused kernel: three Conv1d branches (shifted-slice matmuls) + BN-folded bias
# + ReLU + channel concat, one batch element per grid step.
# ---------------------------------------------------------------------------
def make_input_module_kernel(l_out, branch_cfg):
    """branch_cfg: tuple of (kernel_size, stride, offset, c_out) per branch."""

    def kernel(x_ref, *rest):
        # x_ref : (L_pad, C_in)  channels-last, zero-padded length, one sample
        # rest  : w0, b0, w1, b1, w2, b2, o_ref
        o_ref = rest[-1]
        outs = []
        for bi, (k, s, off, c_out) in enumerate(branch_cfg):
            w_ref = rest[2 * bi]       # (k, C_in, c_out)  BN-folded conv weight
            b_ref = rest[2 * bi + 1]   # (1, c_out)        BN-folded bias
            acc = None
            for kk in range(k):        # conv as K shifted-slice matmuls in VMEM
                if s == 1:
                    sl = x_ref[pl.ds(off + kk, l_out), :]
                else:
                    sl = x_ref[pl.ds(off + kk, l_out, stride=s), :]
                t = jnp.dot(sl, w_ref[kk], preferred_element_type=jnp.float32)
                acc = t if acc is None else acc + t
            outs.append(jnp.maximum(acc + b_ref[...], 0.0))   # ReLU
        # single lane-dense 128-wide store of the channel concatenation
        o_ref[...] = jnp.concatenate(outs, axis=-1)

    return kernel


def input_module_forward(x, params, config, *, eps=1e-5):
    """x: (N, C_in, L) float32 (PyTorch NCL).  Returns (N, sum(C_out), L_out)."""
    n, c_in, l = x.shape
    pads = [p for (_, _, _, p) in config]
    max_pad = max(pads)
    l_pad = l + 2 * max_pad

    l_outs = [(l + 2 * p - k) // s + 1 for (_, k, s, p) in config]
    assert len(set(l_outs)) == 1, "branches must agree on L_out for channel concat"
    l_out = l_outs[0]
    c_outs = [c for (c, _, _, _) in config]
    c_total = sum(c_outs)

    # Channels-last layout + symmetric zero-padding of the length axis (glue).
    x_lc = jnp.transpose(x, (0, 2, 1))                       # (N, L, C_in)
    x_pad = jnp.pad(x_lc, ((0, 0), (max_pad, max_pad), (0, 0)))

    args = [x_pad]
    in_specs = [pl.BlockSpec((None, l_pad, c_in), lambda b: (b, 0, 0))]
    branch_cfg = []
    for bi, (c_out, k, s, p) in enumerate(config):
        pr = params[f"branch_{bi}"]
        # Fold eval-mode BatchNorm1d into the conv weight / bias (exact).
        # TODO(synk): training-mode BatchNorm (batch statistics) not implemented.
        scale = pr["gamma"] / jnp.sqrt(pr["running_var"] + eps)      # (c_out,)
        shift = pr["beta"] - pr["running_mean"] * scale
        w_eff = pr["conv_w"] * scale[:, None, None]                  # (O, C_in, K)
        b_eff = pr["conv_b"] * scale + shift                         # (O,)
        w_t = jnp.transpose(w_eff, (2, 1, 0))                        # (K, C_in, O)
        args += [w_t, b_eff.reshape(1, c_out)]
        in_specs += [
            pl.BlockSpec((k, c_in, c_out), lambda b: (0, 0, 0)),
            pl.BlockSpec((1, c_out), lambda b: (0, 0)),
        ]
        branch_cfg.append((k, s, max_pad - p, c_out))

    kernel = make_input_module_kernel(l_out, tuple(branch_cfg))
    out_lc = pl.pallas_call(
        kernel,
        out_shape=jax.ShapeDtypeStruct((n, l_out, c_total), jnp.float32),
        grid_spec=pltpu.PrefetchScalarGridSpec(
            num_scalar_prefetch=0,
            grid=(n,),
            in_specs=in_specs,
            out_specs=pl.BlockSpec((None, l_out, c_total), lambda b: (b, 0, 0)),
        ),
        compiler_params=pltpu.CompilerParams(
            dimension_semantics=("parallel",),
        ),
    )(*args)
    # Back to PyTorch NCL layout: (N, C_total, L_out).
    return jnp.transpose(out_lc, (0, 2, 1))


# ---------------------------------------------------------------------------
# Pure-JAX (XLA) reference for validation
# ---------------------------------------------------------------------------
def input_module_reference(x, params, config, *, eps=1e-5):
    dn = ("NCH", "OIH", "NCH")
    outs = []
    for bi, (c_out, k, s, p) in enumerate(config):
        pr = params[f"branch_{bi}"]
        h = lax.conv_general_dilated(x, pr["conv_w"], (s,), [(p, p)],
                                     dimension_numbers=dn)
        h = h + pr["conv_b"][None, :, None]
        scale = pr["gamma"] / jnp.sqrt(pr["running_var"] + eps)
        shift = pr["beta"] - pr["running_mean"] * scale
        h = h * scale[None, :, None] + shift[None, :, None]
        outs.append(jnp.maximum(h, 0.0))
    return jnp.concatenate(outs, axis=1)


# ---------------------------------------------------------------------------
def init_params(key, in_channel, config):
    params = {}
    for bi, (c_out, k, s, p) in enumerate(config):
        key, kw, kb, kg, kbe, km, kv = jax.random.split(key, 7)
        bound = 1.0 / np.sqrt(in_channel * k)
        params[f"branch_{bi}"] = {
            "conv_w": jax.random.uniform(kw, (c_out, in_channel, k),
                                         jnp.float32, -bound, bound),
            "conv_b": jax.random.uniform(kb, (c_out,), jnp.float32, -bound, bound),
            "gamma": jax.random.uniform(kg, (c_out,), jnp.float32, 0.5, 1.5),
            "beta": 0.1 * jax.random.normal(kbe, (c_out,), jnp.float32),
            "running_mean": 0.1 * jax.random.normal(km, (c_out,), jnp.float32),
            "running_var": jax.random.uniform(kv, (c_out,), jnp.float32, 0.5, 1.5),
        }
    return params


if __name__ == "__main__":
    # InputModule config: (out_channel, kernel_size, stride, pad) per branch.
    # Same-length branches (stride 1, pad = k // 2) so the channel concat is
    # valid; total output channels 32 + 32 + 64 = 128 (lane-dense).
    config = [(32, 3, 1, 1), (32, 5, 1, 2), (64, 7, 1, 3)]
    in_channel, seq_len, batch = 4, 128, 2

    key = jax.random.PRNGKey(0)
    pkey, xkey = jax.random.split(key)
    params = init_params(pkey, in_channel, config)
    x = jax.random.normal(xkey, (batch, in_channel, seq_len), jnp.float32)

    out = input_module_forward(x, params, config)
    out = jax.block_until_ready(out)
    assert out.shape == (batch, 128, seq_len) and out.dtype == jnp.float32

    ref = jax.block_until_ready(input_module_reference(x, params, config))
    np.testing.assert_allclose(np.asarray(out), np.asarray(ref),
                               rtol=1e-3, atol=1e-3)

    print("KERNEL_OK")
</pallas_src>

<mosaic_0001>
module attributes {stable_mosaic.version = 11 : i64} {
  func.func @kernel(%arg0: i32, %arg1: memref<1x134x4xf32, #tpu.memory_space<vmem>>, %arg2: memref<3x4x32xf32, #tpu.memory_space<vmem>>, %arg3: memref<1x32xf32, #tpu.memory_space<vmem>>, %arg4: memref<5x4x32xf32, #tpu.memory_space<vmem>>, %arg5: memref<1x32xf32, #tpu.memory_space<vmem>>, %arg6: memref<7x4x64xf32, #tpu.memory_space<vmem>>, %arg7: memref<1x64xf32, #tpu.memory_space<vmem>>, %arg8: memref<1x128x128xf32, #tpu.memory_space<vmem>>) attributes {dimension_semantics = [#tpu.dimension_semantics<parallel>], iteration_bounds = array<i64: 2>, scalar_prefetch = 0 : i64, scratch_operands = 0 : i64, tpu.core_type = #tpu.core_type<tc>, window_params = [{transform_indices = @transform_0, window_bounds = array<i64: 1, 134, 4>}, {pipeline_mode = #tpu.pipeline_mode<synchronous>, transform_indices = @transform_1, window_bounds = array<i64: 3, 4, 32>}, {pipeline_mode = #tpu.pipeline_mode<synchronous>, transform_indices = @transform_2, window_bounds = array<i64: 1, 32>}, {pipeline_mode = #tpu.pipeline_mode<synchronous>, transform_indices = @transform_3, window_bounds = array<i64: 5, 4, 32>}, {pipeline_mode = #tpu.pipeline_mode<synchronous>, transform_indices = @transform_4, window_bounds = array<i64: 1, 32>}, {pipeline_mode = #tpu.pipeline_mode<synchronous>, transform_indices = @transform_5, window_bounds = array<i64: 7, 4, 64>}, {pipeline_mode = #tpu.pipeline_mode<synchronous>, transform_indices = @transform_6, window_bounds = array<i64: 1, 64>}, {transform_indices = @transform_7, window_bounds = array<i64: 1, 128, 128>}]} {
    %c0 = arith.constant 0 : index
    %c2 = arith.constant 2 : index
    %c0_0 = arith.constant 0 : index
    %0 = vector.load %arg1[%c0, %c2, %c0_0] : memref<1x134x4xf32, #tpu.memory_space<vmem>>, vector<1x128x4xf32>
    %1 = vector.shape_cast %0 : vector<1x128x4xf32> to vector<128x4xf32>
    %c0_1 = arith.constant 0 : index
    %c0_2 = arith.constant 0 : index
    %c0_3 = arith.constant 0 : index
    %2 = vector.load %arg2[%c0_1, %c0_2, %c0_3] : memref<3x4x32xf32, #tpu.memory_space<vmem>>, vector<1x4x32xf32>
    %3 = vector.shape_cast %2 : vector<1x4x32xf32> to vector<4x32xf32>
    %cst = arith.constant dense<0.000000e+00> : vector<128x32xf32>
    %4 = tpu.matmul %1, %3, %cst {dimension_numbers = #tpu.dot_dimension_numbers<[1], [0], [0], [1], [0, 0, 1, 1], [], []>} : vector<128x4xf32>, vector<4x32xf32>, vector<128x32xf32> -> vector<128x32xf32>
    %c0_4 = arith.constant 0 : index
    %c3 = arith.constant 3 : index
    %c0_5 = arith.constant 0 : index
    %5 = vector.load %arg1[%c0_4, %c3, %c0_5] : memref<1x134x4xf32, #tpu.memory_space<vmem>>, vector<1x128x4xf32>
    %6 = vector.shape_cast %5 : vector<1x128x4xf32> to vector<128x4xf32>
    %c1 = arith.constant 1 : index
    %c0_6 = arith.constant 0 : index
    %c0_7 = arith.constant 0 : index
    %7 = vector.load %arg2[%c1, %c0_6, %c0_7] : memref<3x4x32xf32, #tpu.memory_space<vmem>>, vector<1x4x32xf32>
    %8 = vector.shape_cast %7 : vector<1x4x32xf32> to vector<4x32xf32>
    %cst_8 = arith.constant dense<0.000000e+00> : vector<128x32xf32>
    %9 = tpu.matmul %6, %8, %cst_8 {dimension_numbers = #tpu.dot_dimension_numbers<[1], [0], [0], [1], [0, 0, 1, 1], [], []>} : vector<128x4xf32>, vector<4x32xf32>, vector<128x32xf32> -> vector<128x32xf32>
    %10 = arith.addf %4, %9 : vector<128x32xf32>
    %c0_9 = arith.constant 0 : index
    %c4 = arith.constant 4 : index
    %c0_10 = arith.constant 0 : index
    %11 = vector.load %arg1[%c0_9, %c4, %c0_10] : memref<1x134x4xf32, #tpu.memory_space<vmem>>, vector<1x128x4xf32>
    %12 = vector.shape_cast %11 : vector<1x128x4xf32> to vector<128x4xf32>
    %c2_11 = arith.constant 2 : index
    %c0_12 = arith.constant 0 : index
    %c0_13 = arith.constant 0 : index
    %13 = vector.load %arg2[%c2_11, %c0_12, %c0_13] : memref<3x4x32xf32, #tpu.memory_space<vmem>>, vector<1x4x32xf32>
    %14 = vector.shape_cast %13 : vector<1x4x32xf32> to vector<4x32xf32>
    %cst_14 = arith.constant dense<0.000000e+00> : vector<128x32xf32>
    %15 = tpu.matmul %12, %14, %cst_14 {dimension_numbers = #tpu.dot_dimension_numbers<[1], [0], [0], [1], [0, 0, 1, 1], [], []>} : vector<128x4xf32>, vector<4x32xf32>, vector<128x32xf32> -> vector<128x32xf32>
    %16 = arith.addf %10, %15 : vector<128x32xf32>
    %c0_15 = arith.constant 0 : index
    %c0_16 = arith.constant 0 : index
    %17 = vector.load %arg3[%c0_15, %c0_16] : memref<1x32xf32, #tpu.memory_space<vmem>>, vector<1x32xf32>
    %18 = vector.broadcast %17 : vector<1x32xf32> to vector<128x32xf32>
    %19 = arith.addf %16, %18 : vector<128x32xf32>
    %cst_17 = arith.constant 0.000000e+00 : f32
    %20 = vector.broadcast %cst_17 : f32 to vector<128x32xf32>
    %21 = arith.maximumf %19, %20 : vector<128x32xf32>
    %c0_18 = arith.constant 0 : index
    %c1_19 = arith.constant 1 : index
    %c0_20 = arith.constant 0 : index
    %22 = vector.load %arg1[%c0_18, %c1_19, %c0_20] : memref<1x134x4xf32, #tpu.memory_space<vmem>>, vector<1x128x4xf32>
    %23 = vector.shape_cast %22 : vector<1x128x4xf32> to vector<128x4xf32>
    %c0_21 = arith.constant 0 : index
    %c0_22 = arith.constant 0 : index
    %c0_23 = arith.constant 0 : index
    %24 = vector.load %arg4[%c0_21, %c0_22, %c0_23] : memref<5x4x32xf32, #tpu.memory_space<vmem>>, vector<1x4x32xf32>
    %25 = vector.shape_cast %24 : vector<1x4x32xf32> to vector<4x32xf32>
    %cst_24 = arith.constant dense<0.000000e+00> : vector<128x32xf32>
    %26 = tpu.matmul %23, %25, %cst_24 {dimension_numbers = #tpu.dot_dimension_numbers<[1], [0], [0], [1], [0, 0, 1, 1], [], []>} : vector<128x4xf32>, vector<4x32xf32>, vector<128x32xf32> -> vector<128x32xf32>
    %c0_25 = arith.constant 0 : index
    %c2_26 = arith.constant 2 : index
    %c0_27 = arith.constant 0 : index
    %27 = vector.load %arg1[%c0_25, %c2_26, %c0_27] : memref<1x134x4xf32, #tpu.memory_space<vmem>>, vector<1x128x4xf32>
    %28 = vector.shape_cast %27 : vector<1x128x4xf32> to vector<128x4xf32>
    %c1_28 = arith.constant 1 : index
    %c0_29 = arith.constant 0 : index
    %c0_30 = arith.constant 0 : index
    %29 = vector.load %arg4[%c1_28, %c0_29, %c0_30] : memref<5x4x32xf32, #tpu.memory_space<vmem>>, vector<1x4x32xf32>
    %30 = vector.shape_cast %29 : vector<1x4x32xf32> to vector<4x32xf32>
    %cst_31 = arith.constant dense<0.000000e+00> : vector<128x32xf32>
    %31 = tpu.matmul %28, %30, %cst_31 {dimension_numbers = #tpu.dot_dimension_numbers<[1], [0], [0], [1], [0, 0, 1, 1], [], []>} : vector<128x4xf32>, vector<4x32xf32>, vector<128x32xf32> -> vector<128x32xf32>
    %32 = arith.addf %26, %31 : vector<128x32xf32>
    %c0_32 = arith.constant 0 : index
    %c3_33 = arith.constant 3 : index
    %c0_34 = arith.constant 0 : index
    %33 = vector.load %arg1[%c0_32, %c3_33, %c0_34] : memref<1x134x4xf32, #tpu.memory_space<vmem>>, vector<1x128x4xf32>
    %34 = vector.shape_cast %33 : vector<1x128x4xf32> to vector<128x4xf32>
    %c2_35 = arith.constant 2 : index
    %c0_36 = arith.constant 0 : index
    %c0_37 = arith.constant 0 : index
    %35 = vector.load %arg4[%c2_35, %c0_36, %c0_37] : memref<5x4x32xf32, #tpu.memory_space<vmem>>, vector<1x4x32xf32>
    %36 = vector.shape_cast %35 : vector<1x4x32xf32> to vector<4x32xf32>
    %cst_38 = arith.constant dense<0.000000e+00> : vector<128x32xf32>
    %37 = tpu.matmul %34, %36, %cst_38 {dimension_numbers = #tpu.dot_dimension_numbers<[1], [0], [0], [1], [0, 0, 1, 1], [], []>} : vector<128x4xf32>, vector<4x32xf32>, vector<128x32xf32> -> vector<128x32xf32>
    %38 = arith.addf %32, %37 : vector<128x32xf32>
    %c0_39 = arith.constant 0 : index
    %c4_40 = arith.constant 4 : index
    %c0_41 = arith.constant 0 : index
    %39 = vector.load %arg1[%c0_39, %c4_40, %c0_41] : memref<1x134x4xf32, #tpu.memory_space<vmem>>, vector<1x128x4xf32>
    %40 = vector.shape_cast %39 : vector<1x128x4xf32> to vector<128x4xf32>
    %c3_42 = arith.constant 3 : index
    %c0_43 = arith.constant 0 : index
    %c0_44 = arith.constant 0 : index
    %41 = vector.load %arg4[%c3_42, %c0_43, %c0_44] : memref<5x4x32xf32, #tpu.memory_space<vmem>>, vector<1x4x32xf32>
    %42 = vector.shape_cast %41 : vector<1x4x32xf32> to vector<4x32xf32>
    %cst_45 = arith.constant dense<0.000000e+00> : vector<128x32xf32>
    %43 = tpu.matmul %40, %42, %cst_45 {dimension_numbers = #tpu.dot_dimension_numbers<[1], [0], [0], [1], [0, 0, 1, 1], [], []>} : vector<128x4xf32>, vector<4x32xf32>, vector<128x32xf32> -> vector<128x32xf32>
    %44 = arith.addf %38, %43 : vector<128x32xf32>
    %c0_46 = arith.constant 0 : index
    %c5 = arith.constant 5 : index
    %c0_47 = arith.constant 0 : index
    %45 = vector.load %arg1[%c0_46, %c5, %c0_47] : memref<1x134x4xf32, #tpu.memory_space<vmem>>, vector<1x128x4xf32>
    %46 = vector.shape_cast %45 : vector<1x128x4xf32> to vector<128x4xf32>
    %c4_48 = arith.constant 4 : index
    %c0_49 = arith.constant 0 : index
    %c0_50 = arith.constant 0 : index
    %47 = vector.load %arg4[%c4_48, %c0_49, %c0_50] : memref<5x4x32xf32, #tpu.memory_space<vmem>>, vector<1x4x32xf32>
    %48 = vector.shape_cast %47 : vector<1x4x32xf32> to vector<4x32xf32>
    %cst_51 = arith.constant dense<0.000000e+00> : vector<128x32xf32>
    %49 = tpu.matmul %46, %48, %cst_51 {dimension_numbers = #tpu.dot_dimension_numbers<[1], [0], [0], [1], [0, 0, 1, 1], [], []>} : vector<128x4xf32>, vector<4x32xf32>, vector<128x32xf32> -> vector<128x32xf32>
    %50 = arith.addf %44, %49 : vector<128x32xf32>
    %c0_52 = arith.constant 0 : index
    %c0_53 = arith.constant 0 : index
    %51 = vector.load %arg5[%c0_52, %c0_53] : memref<1x32xf32, #tpu.memory_space<vmem>>, vector<1x32xf32>
    %52 = vector.broadcast %51 : vector<1x32xf32> to vector<128x32xf32>
    %53 = arith.addf %50, %52 : vector<128x32xf32>
    %cst_54 = arith.constant 0.000000e+00 : f32
    %54 = vector.broadcast %cst_54 : f32 to vector<128x32xf32>
    %55 = arith.maximumf %53, %54 : vector<128x32xf32>
    %c0_55 = arith.constant 0 : index
    %c0_56 = arith.constant 0 : index
    %c0_57 = arith.constant 0 : index
    %56 = vector.load %arg1[%c0_55, %c0_56, %c0_57] : memref<1x134x4xf32, #tpu.memory_space<vmem>>, vector<1x128x4xf32>
    %57 = vector.shape_cast %56 : vector<1x128x4xf32> to vector<128x4xf32>
    %c0_58 = arith.constant 0 : index
    %c0_59 = arith.constant 0 : index
    %c0_60 = arith.constant 0 : index
    %58 = vector.load %arg6[%c0_58, %c0_59, %c0_60] : memref<7x4x64xf32, #tpu.memory_space<vmem>>, vector<1x4x64xf32>
    %59 = vector.shape_cast %58 : vector<1x4x64xf32> to vector<4x64xf32>
    %cst_61 = arith.constant dense<0.000000e+00> : vector<128x64xf32>
    %60 = tpu.matmul %57, %59, %cst_61 {dimension_numbers = #tpu.dot_dimension_numbers<[1], [0], [0], [1], [0, 0, 1, 1], [], []>} : vector<128x4xf32>, vector<4x64xf32>, vector<128x64xf32> -> vector<128x64xf32>
    %c0_62 = arith.constant 0 : index
    %c1_63 = arith.constant 1 : index
    %c0_64 = arith.constant 0 : index
    %61 = vector.load %arg1[%c0_62, %c1_63, %c0_64] : memref<1x134x4xf32, #tpu.memory_space<vmem>>, vector<1x128x4xf32>
    %62 = vector.shape_cast %61 : vector<1x128x4xf32> to vector<128x4xf32>
    %c1_65 = arith.constant 1 : index
    %c0_66 = arith.constant 0 : index
    %c0_67 = arith.constant 0 : index
    %63 = vector.load %arg6[%c1_65, %c0_66, %c0_67] : memref<7x4x64xf32, #tpu.memory_space<vmem>>, vector<1x4x64xf32>
    %64 = vector.shape_cast %63 : vector<1x4x64xf32> to vector<4x64xf32>
    %cst_68 = arith.constant dense<0.000000e+00> : vector<128x64xf32>
    %65 = tpu.matmul %62, %64, %cst_68 {dimension_numbers = #tpu.dot_dimension_numbers<[1], [0], [0], [1], [0, 0, 1, 1], [], []>} : vector<128x4xf32>, vector<4x64xf32>, vector<128x64xf32> -> vector<128x64xf32>
    %66 = arith.addf %60, %65 : vector<128x64xf32>
    %c0_69 = arith.constant 0 : index
    %c2_70 = arith.constant 2 : index
    %c0_71 = arith.constant 0 : index
    %67 = vector.load %arg1[%c0_69, %c2_70, %c0_71] : memref<1x134x4xf32, #tpu.memory_space<vmem>>, vector<1x128x4xf32>
    %68 = vector.shape_cast %67 : vector<1x128x4xf32> to vector<128x4xf32>
    %c2_72 = arith.constant 2 : index
    %c0_73 = arith.constant 0 : index
    %c0_74 = arith.constant 0 : index
    %69 = vector.load %arg6[%c2_72, %c0_73, %c0_74] : memref<7x4x64xf32, #tpu.memory_space<vmem>>, vector<1x4x64xf32>
    %70 = vector.shape_cast %69 : vector<1x4x64xf32> to vector<4x64xf32>
    %cst_75 = arith.constant dense<0.000000e+00> : vector<128x64xf32>
    %71 = tpu.matmul %68, %70, %cst_75 {dimension_numbers = #tpu.dot_dimension_numbers<[1], [0], [0], [1], [0, 0, 1, 1], [], []>} : vector<128x4xf32>, vector<4x64xf32>, vector<128x64xf32> -> vector<128x64xf32>
    %72 = arith.addf %66, %71 : vector<128x64xf32>
    %c0_76 = arith.constant 0 : index
    %c3_77 = arith.constant 3 : index
    %c0_78 = arith.constant 0 : index
    %73 = vector.load %arg1[%c0_76, %c3_77, %c0_78] : memref<1x134x4xf32, #tpu.memory_space<vmem>>, vector<1x128x4xf32>
    %74 = vector.shape_cast %73 : vector<1x128x4xf32> to vector<128x4xf32>
    %c3_79 = arith.constant 3 : index
    %c0_80 = arith.constant 0 : index
    %c0_81 = arith.constant 0 : index
    %75 = vector.load %arg6[%c3_79, %c0_80, %c0_81] : memref<7x4x64xf32, #tpu.memory_space<vmem>>, vector<1x4x64xf32>
    %76 = vector.shape_cast %75 : vector<1x4x64xf32> to vector<4x64xf32>
    %cst_82 = arith.constant dense<0.000000e+00> : vector<128x64xf32>
    %77 = tpu.matmul %74, %76, %cst_82 {dimension_numbers = #tpu.dot_dimension_numbers<[1], [0], [0], [1], [0, 0, 1, 1], [], []>} : vector<128x4xf32>, vector<4x64xf32>, vector<128x64xf32> -> vector<128x64xf32>
    %78 = arith.addf %72, %77 : vector<128x64xf32>
    %c0_83 = arith.constant 0 : index
    %c4_84 = arith.constant 4 : index
    %c0_85 = arith.constant 0 : index
    %79 = vector.load %arg1[%c0_83, %c4_84, %c0_85] : memref<1x134x4xf32, #tpu.memory_space<vmem>>, vector<1x128x4xf32>
    %80 = vector.shape_cast %79 : vector<1x128x4xf32> to vector<128x4xf32>
    %c4_86 = arith.constant 4 : index
    %c0_87 = arith.constant 0 : index
    %c0_88 = arith.constant 0 : index
    %81 = vector.load %arg6[%c4_86, %c0_87, %c0_88] : memref<7x4x64xf32, #tpu.memory_space<vmem>>, vector<1x4x64xf32>
    %82 = vector.shape_cast %81 : vector<1x4x64xf32> to vector<4x64xf32>
    %cst_89 = arith.constant dense<0.000000e+00> : vector<128x64xf32>
    %83 = tpu.matmul %80, %82, %cst_89 {dimension_numbers = #tpu.dot_dimension_numbers<[1], [0], [0], [1], [0, 0, 1, 1], [], []>} : vector<128x4xf32>, vector<4x64xf32>, vector<128x64xf32> -> vector<128x64xf32>
    %84 = arith.addf %78, %83 : vector<128x64xf32>
    %c0_90 = arith.constant 0 : index
    %c5_91 = arith.constant 5 : index
    %c0_92 = arith.constant 0 : index
    %85 = vector.load %arg1[%c0_90, %c5_91, %c0_92] : memref<1x134x4xf32, #tpu.memory_space<vmem>>, vector<1x128x4xf32>
    %86 = vector.shape_cast %85 : vector<1x128x4xf32> to vector<128x4xf32>
    %c5_93 = arith.constant 5 : index
    %c0_94 = arith.constant 0 : index
    %c0_95 = arith.constant 0 : index
    %87 = vector.load %arg6[%c5_93, %c0_94, %c0_95] : memref<7x4x64xf32, #tpu.memory_space<vmem>>, vector<1x4x64xf32>
    %88 = vector.shape_cast %87 : vector<1x4x64xf32> to vector<4x64xf32>
    %cst_96 = arith.constant dense<0.000000e+00> : vector<128x64xf32>
    %89 = tpu.matmul %86, %88, %cst_96 {dimension_numbers = #tpu.dot_dimension_numbers<[1], [0], [0], [1], [0, 0, 1, 1], [], []>} : vector<128x4xf32>, vector<4x64xf32>, vector<128x64xf32> -> vector<128x64xf32>
    %90 = arith.addf %84, %89 : vector<128x64xf32>
    %c0_97 = arith.constant 0 : index
    %c6 = arith.constant 6 : index
    %c0_98 = arith.constant 0 : index
    %91 = vector.load %arg1[%c0_97, %c6, %c0_98] : memref<1x134x4xf32, #tpu.memory_space<vmem>>, vector<1x128x4xf32>
    %92 = vector.shape_cast %91 : vector<1x128x4xf32> to vector<128x4xf32>
    %c6_99 = arith.constant 6 : index
    %c0_100 = arith.constant 0 : index
    %c0_101 = arith.constant 0 : index
    %93 = vector.load %arg6[%c6_99, %c0_100, %c0_101] : memref<7x4x64xf32, #tpu.memory_space<vmem>>, vector<1x4x64xf32>
    %94 = vector.shape_cast %93 : vector<1x4x64xf32> to vector<4x64xf32>
    %cst_102 = arith.constant dense<0.000000e+00> : vector<128x64xf32>
    %95 = tpu.matmul %92, %94, %cst_102 {dimension_numbers = #tpu.dot_dimension_numbers<[1], [0], [0], [1], [0, 0, 1, 1], [], []>} : vector<128x4xf32>, vector<4x64xf32>, vector<128x64xf32> -> vector<128x64xf32>
    %96 = arith.addf %90, %95 : vector<128x64xf32>
    %c0_103 = arith.constant 0 : index
    %c0_104 = arith.constant 0 : index
    %97 = vector.load %arg7[%c0_103, %c0_104] : memref<1x64xf32, #tpu.memory_space<vmem>>, vector<1x64xf32>
    %98 = vector.broadcast %97 : vector<1x64xf32> to vector<128x64xf32>
    %99 = arith.addf %96, %98 : vector<128x64xf32>
    %cst_105 = arith.constant 0.000000e+00 : f32
    %100 = vector.broadcast %cst_105 : f32 to vector<128x64xf32>
    %101 = arith.maximumf %99, %100 : vector<128x64xf32>
    %102 = tpu.concatenate %21, %55, %101 in 1 : vector<128x32xf32>, vector<128x32xf32>, vector<128x64xf32> -> vector<128x128xf32>
    %c0_106 = arith.constant 0 : index
    %c0_107 = arith.constant 0 : index
    %c0_108 = arith.constant 0 : index
    %103 = vector.load %arg8[%c0_106, %c0_107, %c0_108] : memref<1x128x128xf32, #tpu.memory_space<vmem>>, vector<1x128x128xf32>
    %104 = vector.shape_cast %103 : vector<1x128x128xf32> to vector<128x128xf32>
    %105 = vector.shape_cast %102 : vector<128x128xf32> to vector<1x128x128xf32>
    tpu.vector_store %arg8[%c0_106, %c0_107, %c0_108], %105 {strides = array<i32>} : memref<1x128x128xf32, #tpu.memory_space<vmem>>, vector<1x128x128xf32>,
    return
  }
  func.func @transform_0(%arg0: i32) -> (i32, i32, i32) {
    %c0_i32 = arith.constant 0 : i32
    %c0_i32_0 = arith.constant 0 : i32
    %c0_i32_1 = arith.constant 0 : i32
    return %arg0, %c0_i32, %c0_i32_0 : i32, i32, i32
  }
  func.func @transform_1(%arg0: i32) -> (i32, i32, i32) {
    %c0_i32 = arith.constant 0 : i32
    %c0_i32_0 = arith.constant 0 : i32
    %c0_i32_1 = arith.constant 0 : i32
    %c0_i32_2 = arith.constant 0 : i32
    return %c0_i32, %c0_i32_0, %c0_i32_1 : i32, i32, i32
  }
  func.func @transform_2(%arg0: i32) -> (i32, i32) {
    %c0_i32 = arith.constant 0 : i32
    %c0_i32_0 = arith.constant 0 : i32
    %c0_i32_1 = arith.constant 0 : i32
    return %c0_i32, %c0_i32_0 : i32, i32
  }
  func.func @transform_3(%arg0: i32) -> (i32, i32, i32) {
    %c0_i32 = arith.constant 0 : i32
    %c0_i32_0 = arith.constant 0 : i32
    %c0_i32_1 = arith.constant 0 : i32
    %c0_i32_2 = arith.constant 0 : i32
    return %c0_i32, %c0_i32_0, %c0_i32_1 : i32, i32, i32
  }
  func.func @transform_4(%arg0: i32) -> (i32, i32) {
    %c0_i32 = arith.constant 0 : i32
    %c0_i32_0 = arith.constant 0 : i32
    %c0_i32_1 = arith.constant 0 : i32
    return %c0_i32, %c0_i32_0 : i32, i32
  }
  func.func @transform_5(%arg0: i32) -> (i32, i32, i32) {
    %c0_i32 = arith.constant 0 : i32
    %c0_i32_0 = arith.constant 0 : i32
    %c0_i32_1 = arith.constant 0 : i32
    %c0_i32_2 = arith.constant 0 : i32
    return %c0_i32, %c0_i32_0, %c0_i32_1 : i32, i32, i32
  }
  func.func @transform_6(%arg0: i32) -> (i32, i32) {
    %c0_i32 = arith.constant 0 : i32
    %c0_i32_0 = arith.constant 0 : i32
    %c0_i32_1 = arith.constant 0 : i32
    return %c0_i32, %c0_i32_0 : i32, i32
  }
  func.func @transform_7(%arg0: i32) -> (i32, i32, i32) {
    %c0_i32 = arith.constant 0 : i32
    %c0_i32_0 = arith.constant 0 : i32
    %c0_i32_1 = arith.constant 0 : i32
    return %arg0, %c0_i32, %c0_i32_0 : i32, i32, i32
  }
}

</mosaic_0001>

<llo_original>
// kernel: tpu_custom_call.1
$region0: #{tpu_custom_call.1}
  #allocation0 [shape = 'u32[]', space=smem, size = 0x4, offset = 0x4, fixed_abs, tag = 'smem constant byte address 0x4 - core index']
  #allocation1 [shape = 'u32[72,128]{1,0:T(1,128)}', space=vmem, size = 0x9000, scoped, tag = 'internal scratch']
  %s0 = inlined_call_operand.vmem [shape: f32[2,134,4], index: 0, kind: input, shape index: {}]
  %s1 = inlined_call_operand.vmem [shape: f32[3,4,32], index: 1, kind: input, shape index: {}]
  %s2 = inlined_call_operand.vmem [shape: f32[1,32], index: 2, kind: input, shape index: {}]
  %s3 = inlined_call_operand.vmem [shape: f32[5,4,32], index: 3, kind: input, shape index: {}]
  %s4 = inlined_call_operand.vmem [shape: f32[1,32], index: 4, kind: input, shape index: {}]
  %s5 = inlined_call_operand.vmem [shape: f32[7,4,64], index: 5, kind: input, shape index: {}]
  %s6 = inlined_call_operand.vmem [shape: f32[1,64], index: 6, kind: input, shape index: {}]
  %s7 = inlined_call_operand.hbm [shape: f32[2,128,128], index: 7, kind: output, shape index: {}]
  %s8 = sld [smem:[#allocation0]]
  $region61: #{tpu_custom_call.1} parent=0
    _
  %s10 = ssub.s32 1, %s8
  %s11 = scalar_select 0, %s10, %s8
  $region1: #{tpu_custom_call.1} parent=0
    #allocation2 [shape = 'u8[131072]{0}', space=vmem, size = 0x20000, scoped, tag = 'output window, operand 0']
    #allocation3 [shape = 's32[2]{0}', space=sflag, size = 0x8, scoped, tag = 'scoped memory for tpu_custom_call.1']
    %12 = vsyncpa [#allocation3], 0
    %s13 = scalar_lea.sflag [#allocation3], 1
    %14 = vsyncpa %s13, 0
    loop: start=0, step=1, limit=4
    $region2: #{tpu_custom_call.1} parent=1 // loop_pre_header
      _
    $region3: #{tpu_custom_call.1} parent=1 // loop_header
      %s16 = sphi 0, %s20
      %p17 = scmp.ge.s32.totalorder %s16, 4
      %s26 = sphi 0, %s28
      %s29 = sphi 0, %s26
      %s30 = sphi 0, %s29
      %s46 = sphi 0, %s30
      %s50 = sphi 0, %s50
      %s52 = sphi 0, %s50
      %s53 = sphi 0, %s52
      %s67 = sphi 0, %s53
      %s71 = sphi 0, %s71
      %s73 = sphi 0, %s71
      %s74 = sphi 0, %s73
      %s88 = sphi 0, %s74
      %s92 = sphi 0, %s92
      %s94 = sphi 0, %s92
      %s95 = sphi 0, %s94
      %s109 = sphi 0, %s95
      %s113 = sphi 0, %s113
      %s115 = sphi 0, %s113
      %s116 = sphi 0, %s115
      %s130 = sphi 0, %s116
      %s134 = sphi 0, %s134
      %s136 = sphi 0, %s134
      %s137 = sphi 0, %s136
      %s151 = sphi 0, %s137
      %s155 = sphi 0, %s155
      %s157 = sphi 0, %s155
      %s158 = sphi 0, %s157
      %s172 = sphi 0, %s158
      %s178 = sphi 0, %s180
      %s181 = sphi 0, %s178
      %s182 = sphi 0, %s181
      %s198 = sphi 0, %s182
    $region4: #{tpu_custom_call.1} parent=1 // loop_header_branch
      %19 = sbr.rel (%p17) target = $region8
    $region5: #{tpu_custom_call.1} parent=1 // loop_body
      %s21 = ssub.s32 %s16, 1
      %s22 = ssub.s32 %s16, 2
      %s23 = sadd.s32 %s16, 1
      %s24 = ssub.s32 %s16, %s23
      %p25 = scmp.eq.s32.totalorder %s24, 0
      %s27 = sadd.s32 %s26, 1
      %s28 = scalar_select %p25, %s26, %s27
      %p31 = pneg %p25
      %p32 = scmp.eq.s32.totalorder %s16, 1
      %p33 = por %p31, %p32
      %p34 = scmp.ne.s32.totalorder %s26, %s29
      %p35 = scmp.eq.s32.totalorder %s16, 0
      %p36 = por %p34, %p35
      %p37 = scmp.ne.s32.totalorder %s26, %s29
      %p38 = scmp.eq.s32.totalorder %s21, 1
      %p39 = por %p37, %p38
      %p40 = scmp.ne.s32.totalorder %s29, %s30
      %p41 = scmp.eq.s32.totalorder %s21, 0
      %p42 = por %p40, %p41
      %p43 = scmp.ne.s32.totalorder %s29, %s30
      %p44 = scmp.eq.s32.totalorder %s22, 1
      %p45 = por %p43, %p44
      %p47 = scmp.ne.s32.totalorder %s30, %s46
      %p48 = scmp.eq.s32.totalorder %s22, 0
      %p49 = por %p47, %p48
      %s51 = sadd.s32 %s50, 1
      %p54 = scmp.eq.s32.totalorder %s16, 1
      %p55 = scmp.ne.s32.totalorder %s50, %s52
      %p56 = scmp.eq.s32.totalorder %s16, 0
      %p57 = por %p55, %p56
      %p58 = scmp.ne.s32.totalorder %s50, %s52
      %p59 = scmp.eq.s32.totalorder %s21, 1
      %p60 = por %p58, %p59
      %p61 = scmp.ne.s32.totalorder %s52, %s53
      %p62 = scmp.eq.s32.totalorder %s21, 0
      %p63 = por %p61, %p62
      %p64 = scmp.ne.s32.totalorder %s52, %s53
      %p65 = scmp.eq.s32.totalorder %s22, 1
      %p66 = por %p64, %p65
      %p68 = scmp.ne.s32.totalorder %s53, %s67
      %p69 = scmp.eq.s32.totalorder %s22, 0
      %p70 = por %p68, %p69
      %s72 = sadd.s32 %s71, 1
      %p75 = scmp.eq.s32.totalorder %s16, 1
      %p76 = scmp.ne.s32.totalorder %s71, %s73
      %p77 = scmp.eq.s32.totalorder %s16, 0
      %p78 = por %p76, %p77
      %p79 = scmp.ne.s32.totalorder %s71, %s73
      %p80 = scmp.eq.s32.totalorder %s21, 1
      %p81 = por %p79, %p80
      %p82 = scmp.ne.s32.totalorder %s73, %s74
      %p83 = scmp.eq.s32.totalorder %s21, 0
      %p84 = por %p82, %p83
      %p85 = scmp.ne.s32.totalorder %s73, %s74
      %p86 = scmp.eq.s32.totalorder %s22, 1
      %p87 = por %p85, %p86
      %p89 = scmp.ne.s32.totalorder %s74, %s88
      %p90 = scmp.eq.s32.totalorder %s22, 0
      %p91 = por %p89, %p90
      %s93 = sadd.s32 %s92, 1
      %p96 = scmp.eq.s32.totalorder %s16, 1
      %p97 = scmp.ne.s32.totalorder %s92, %s94
      %p98 = scmp.eq.s32.totalorder %s16, 0
      %p99 = por %p97, %p98
      %p100 = scmp.ne.s32.totalorder %s92, %s94
      %p101 = scmp.eq.s32.totalorder %s21, 1
      %p102 = por %p100, %p101
      %p103 = scmp.ne.s32.totalorder %s94, %s95
      %p104 = scmp.eq.s32.totalorder %s21, 0
      %p105 = por %p103, %p104
      %p106 = scmp.ne.s32.totalorder %s94, %s95
      %p107 = scmp.eq.s32.totalorder %s22, 1
      %p108 = por %p106, %p107
      %p110 = scmp.ne.s32.totalorder %s95, %s109
      %p111 = scmp.eq.s32.totalorder %s22, 0
      %p112 = por %p110, %p111
      %s114 = sadd.s32 %s113, 1
      %p117 = scmp.eq.s32.totalorder %s16, 1
      %p118 = scmp.ne.s32.totalorder %s113, %s115
      %p119 = scmp.eq.s32.totalorder %s16, 0
      %p120 = por %p118, %p119
      %p121 = scmp.ne.s32.totalorder %s113, %s115
      %p122 = scmp.eq.s32.totalorder %s21, 1
      %p123 = por %p121, %p122
      %p124 = scmp.ne.s32.totalorder %s115, %s116
      %p125 = scmp.eq.s32.totalorder %s21, 0
      %p126 = por %p124, %p125
      %p127 = scmp.ne.s32.totalorder %s115, %s116
      %p128 = scmp.eq.s32.totalorder %s22, 1
      %p129 = por %p127, %p128
      %p131 = scmp.ne.s32.totalorder %s116, %s130
      %p132 = scmp.eq.s32.totalorder %s22, 0
      %p133 = por %p131, %p132
      %s135 = sadd.s32 %s134, 1
      %p138 = scmp.eq.s32.totalorder %s16, 1
      %p139 = scmp.ne.s32.totalorder %s134, %s136
      %p140 = scmp.eq.s32.totalorder %s16, 0
      %p141 = por %p139, %p140
      %p142 = scmp.ne.s32.totalorder %s134, %s136
      %p143 = scmp.eq.s32.totalorder %s21, 1
      %p144 = por %p142, %p143
      %p145 = scmp.ne.s32.totalorder %s136, %s137
      %p146 = scmp.eq.s32.totalorder %s21, 0
      %p147 = por %p145, %p146
      %p148 = scmp.ne.s32.totalorder %s136, %s137
      %p149 = scmp.eq.s32.totalorder %s22, 1
      %p150 = por %p148, %p149
      %p152 = scmp.ne.s32.totalorder %s137, %s151
      %p153 = scmp.eq.s32.totalorder %s22, 0
      %p154 = por %p152, %p153
      %s156 = sadd.s32 %s155, 1
      %p159 = scmp.eq.s32.totalorder %s16, 1
      %p160 = scmp.ne.s32.totalorder %s155, %s157
      %p161 = scmp.eq.s32.totalorder %s16, 0
      %p162 = por %p160, %p161
      %p163 = scmp.ne.s32.totalorder %s155, %s157
      %p164 = scmp.eq.s32.totalorder %s21, 1
      %p165 = por %p163, %p164
      %p166 = scmp.ne.s32.totalorder %s157, %s158
      %p167 = scmp.eq.s32.totalorder %s21, 0
      %p168 = por %p166, %p167
      %p169 = scmp.ne.s32.totalorder %s157, %s158
      %p170 = scmp.eq.s32.totalorder %s22, 1
      %p171 = por %p169, %p170
      %p173 = scmp.ne.s32.totalorder %s158, %s172
      %p174 = scmp.eq.s32.totalorder %s22, 0
      %p175 = por %p173, %p174
      %s176 = ssub.s32 %s16, %s23
      %p177 = scmp.eq.s32.totalorder %s176, 0
      %s179 = sadd.s32 %s178, 1
      %s180 = scalar_select %p177, %s178, %s179
      %p183 = pneg %p177
      %p184 = scmp.eq.s32.totalorder %s16, 1
      %p185 = por %p183, %p184
      %p186 = scmp.ne.s32.totalorder %s178, %s181
      %p187 = scmp.eq.s32.totalorder %s16, 0
      %p188 = por %p186, %p187
      %p189 = scmp.ne.s32.totalorder %s178, %s181
      %p190 = scmp.eq.s32.totalorder %s21, 1
      %p191 = por %p189, %p190
      %p192 = scmp.ne.s32.totalorder %s181, %s182
      %p193 = scmp.eq.s32.totalorder %s21, 0
      %p194 = por %p192, %p193
      %p195 = scmp.ne.s32.totalorder %s181, %s182
      %p196 = scmp.eq.s32.totalorder %s22, 1
      %p197 = por %p195, %p196
      %p199 = scmp.ne.s32.totalorder %s182, %s198
      %p200 = scmp.eq.s32.totalorder %s22, 0
      %p201 = por %p199, %p200
      %p202 = scmp.le.s32.totalorder 1, %s16
      %p203 = scmp.lt.s32.totalorder %s16, 3
      %p204 = pnand %p202, %p203
      %p205 = pneg %p204
      // Predicated region
      $region9: #{tpu_custom_call.1} parent=5 // pred_check
        _
      $region10: #{tpu_custom_call.1} parent=5 // pred_check_branch
        %207 = sbr.rel (%p204) target = $region12
      $region11: #{tpu_custom_call.1} parent=5 // pred_region
        %s208 = ssub.s32 %s16, 1
        // Predicated region
        $region13: #{tpu_custom_call.1} parent=11 // pred_check
          %p209 = pneg %p63
        $region14: #{tpu_custom_call.1} parent=11 // pred_check_branch
          %211 = sbr.rel (%p209) target = $region16
        $region15: #{tpu_custom_call.1} parent=11 // pred_region
          _
        $region16: #{tpu_custom_call.1} parent=11 // pred_fallthru
          _
        // Predicated region
        $region17: #{tpu_custom_call.1} parent=11 // pred_check
          %p212 = pneg %p84
        $region18: #{tpu_custom_call.1} parent=11 // pred_check_branch
          %214 = sbr.rel (%p212) target = $region20
        $region19: #{tpu_custom_call.1} parent=11 // pred_region
          _
        $region20: #{tpu_custom_call.1} parent=11 // pred_fallthru
          _
        // Predicated region
        $region21: #{tpu_custom_call.1} parent=11 // pred_check
          %p215 = pneg %p105
        $region22: #{tpu_custom_call.1} parent=11 // pred_check_branch
          %217 = sbr.rel (%p215) target = $region24
        $region23: #{tpu_custom_call.1} parent=11 // pred_region
          _
        $region24: #{tpu_custom_call.1} parent=11 // pred_fallthru
          _
        // Predicated region
        $region25: #{tpu_custom_call.1} parent=11 // pred_check
          %p218 = pneg %p126
        $region26: #{tpu_custom_call.1} parent=11 // pred_check_branch
          %220 = sbr.rel (%p218) target = $region28
        $region27: #{tpu_custom_call.1} parent=11 // pred_region
          _
        $region28: #{tpu_custom_call.1} parent=11 // pred_fallthru
          _
        // Predicated region
        $region29: #{tpu_custom_call.1} parent=11 // pred_check
          %p221 = pneg %p147
        $region30: #{tpu_custom_call.1} parent=11 // pred_check_branch
          %223 = sbr.rel (%p221) target = $region32
        $region31: #{tpu_custom_call.1} parent=11 // pred_region
          _
        $region32: #{tpu_custom_call.1} parent=11 // pred_fallthru
          _
        // Predicated region
        $region33: #{tpu_custom_call.1} parent=11 // pred_check
          %p224 = pneg %p168
        $region34: #{tpu_custom_call.1} parent=11 // pred_check_branch
          %226 = sbr.rel (%p224) target = $region36
        $region35: #{tpu_custom_call.1} parent=11 // pred_region
          _
        $region36: #{tpu_custom_call.1} parent=11 // pred_fallthru
          _
      $region12: #{tpu_custom_call.1} parent=5 // pred_fallthru
        _
      %p227 = scmp.lt.s32.totalorder %s16, 2
      // Predicated region
      $region37: #{tpu_custom_call.1} parent=5 // pred_check
        %p228 = pneg %p227
      $region38: #{tpu_custom_call.1} parent=5 // pred_check_branch
        %230 = sbr.rel (%p228) target = $region40
      $region39: #{tpu_custom_call.1} parent=5 // pred_region
        // Predicated region
        $region41: #{tpu_custom_call.1} parent=39 // pred_check
          %p231 = pneg %p36
        $region42: #{tpu_custom_call.1} parent=39 // pred_check_branch
          %233 = sbr.rel (%p231) target = $region44
        $region43: #{tpu_custom_call.1} parent=39 // pred_region
          %p234 = scmp.lt.s32.totalorder %s16, 1
          %s235 = scalar_select %p234, %s16, 1
          %s236 = smul.addr %s235, 17
          %s237 = smul.addr %s236, 8
          %s238 = scalar_lea.vmem %s0, %s237
        $region44: #{tpu_custom_call.1} parent=39 // pred_fallthru
          _
      $region40: #{tpu_custom_call.1} parent=5 // pred_fallthru
        _
      %p239 = scmp.le.s32.totalorder 1, %s16
      %p240 = scmp.lt.s32.totalorder %s16, 3
      %p241 = pnand %p239, %p240
      %p242 = pneg %p241
      // Predicated region
      $region45: #{tpu_custom_call.1} parent=5 // pred_check
        _
      $region46: #{tpu_custom_call.1} parent=5 // pred_check_branch
        %244 = sbr.rel (%p241) target = $region48
      $region47: #{tpu_custom_call.1} parent=5 // pred_region
        %s245 = ssub.s32 %s16, 1
        %p246 = scmp.lt.s32.totalorder %s21, 1
        %s247 = scalar_select %p246, %s21, 1
        %s248 = smul.addr %s247, 17
        %s249 = smul.addr %s248, 8
        %s250 = scalar_lea.vmem %s0, %s249
        %p251 = pneg %p42
        %p252 = pneg %p39
        %p253 = pneg %p63
        %p254 = pneg %p60
        %p255 = pneg %p84
        %p256 = pneg %p81
        %p257 = pneg %p105
        %p258 = pneg %p102
        %p259 = pneg %p126
        %p260 = pneg %p123
        %p261 = pneg %p147
        %p262 = pneg %p144
        %p263 = pneg %p168
        %p264 = pneg %p165
        %p265 = pneg %p194
        %p266 = pneg %p191
        %s267 = sand.u32 %s181, 1
        %s268 = scalar_lea.sflag [#allocation3], %s267
        %s269 = sand.u32 %s181, 1
        %s270 = smul.addr %s269, 128
        %s271 = scalar_lea.vmem [#allocation2], %s270
        %p272 = scmp.lt.s32.totalorder %s21, 1
        %s273 = scalar_select %p272, %s21, 1
        %s274 = smul.addr %s273, 17
        %s275 = smul.addr %s274, 8
        %s276 = scalar_lea.vmem %s0, %s275
        %v277 = vld [vmem:[%s276 + $0x2] sm:$0xff]
        %v278 = vld [vmem:[%s276 + $0xa] sm:$0xff]
        %v279 = vld [vmem:[%s276 + $0x12] sm:$0xff]
        %v280 = vld [vmem:[%s276 + $0x1a] sm:$0xff]
        %v281 = vld [vmem:[%s276 + $0x22] sm:$0xff]
        %v282 = vld [vmem:[%s276 + $0x2a] sm:$0xff]
        %v283 = vld [vmem:[%s276 + $0x32] sm:$0xff]
        %v284 = vld [vmem:[%s276 + $0x3a] sm:$0xff]
        %v285 = vld [vmem:[%s276 + $0x42] sm:$0xff]
        %v286 = vld [vmem:[%s276 + $0x4a] sm:$0xff]
        %v287 = vld [vmem:[%s276 + $0x52] sm:$0xff]
        %v288 = vld [vmem:[%s276 + $0x5a] sm:$0xff]
        %v289 = vld [vmem:[%s276 + $0x62] sm:$0xff]
        %v290 = vld [vmem:[%s276 + $0x6a] sm:$0xff]
        %v291 = vld [vmem:[%s276 + $0x72] sm:$0xff]
        %v292 = vld [vmem:[%s276 + $0x7a] sm:$0xff]
        %v293 = vld [vmem:[%s1] sm:$0xf]
        %v294 = vld [vmem:[%s276 + $0x3] sm:$0xff]
        %v295 = vld [vmem:[%s276 + $0xb] sm:$0xff]
        %v296 = vld [vmem:[%s276 + $0x13] sm:$0xff]
        %v297 = vld [vmem:[%s276 + $0x1b] sm:$0xff]
        %v298 = vld [vmem:[%s276 + $0x23] sm:$0xff]
        %v299 = vld [vmem:[%s276 + $0x2b] sm:$0xff]
        %v300 = vld [vmem:[%s276 + $0x33] sm:$0xff]
        %v301 = vld [vmem:[%s276 + $0x3b] sm:$0xff]
        %v302 = vld [vmem:[%s276 + $0x43] sm:$0xff]
        %v303 = vld [vmem:[%s276 + $0x4b] sm:$0xff]
        %v304 = vld [vmem:[%s276 + $0x53] sm:$0xff]
        %v305 = vld [vmem:[%s276 + $0x5b] sm:$0xff]
        %v306 = vld [vmem:[%s276 + $0x63] sm:$0xff]
        %v307 = vld [vmem:[%s276 + $0x6b] sm:$0xff]
        %v308 = vld [vmem:[%s276 + $0x73] sm:$0xff]
        %v309 = vld [vmem:[%s276 + $0x7b] sm:$0xff]
        %s310 = scalar_lea.vmem %s1, 4
        %v311 = vld [vmem:[%s310] sm:$0xf]
        %vm312 = vcmask 31744
        %v314 = vsel %vm312, %v294, 0
        %v317 = vsel %vm312, %v295, 0
        %v320 = vsel %vm312, %v296, 0
        %v323 = vsel %vm312, %v297, 0
        %v326 = vsel %vm312, %v298, 0
        %v329 = vsel %vm312, %v299, 0
        %v332 = vsel %vm312, %v300, 0
        %v335 = vsel %vm312, %v301, 0
        %v338 = vsel %vm312, %v302, 0
        %v341 = vsel %vm312, %v303, 0
        %v344 = vsel %vm312, %v304, 0
        %v347 = vsel %vm312, %v305, 0
        %v350 = vsel %vm312, %v306, 0
        %v353 = vsel %vm312, %v307, 0
        %v356 = vsel %vm312, %v308, 0
        %v359 = vsel %vm312, %v309, 0
        %vm361 = vcmask 1043456
        %v363 = vsel %vm361, %v311, 0
        %365 = vmatpush.msra.mxu0 0.0
        %366 = vmatpush.msra.mxu0 0.0
        %367 = vmatpush.msra.mxu0 0.0
        %368 = vmatpush.msra.mxu0 0.0
        %369 = vmatpush.msra.mxu0 0.0
        %370 = vmatpush.msra.mxu0 0.0
        %371 = vmatpush.msra.mxu0 0.0
        %372 = vmatpush.msra.mxu0 0.0
        %373 = vmatpush.msra.mxu0 0.0
        %374 = vmatpush.msra.mxu0 0.0
        %375 = vmatpush.msra.mxu0 0.0
        %376 = vmatpush.msra.mxu0 0.0
        %377 = vmatpush.msra.mxu0 0.0
        %378 = vmatpush.msra.mxu0 0.0
        %379 = vmatpush.msra.mxu0 0.0
        %380 = vmatpush.msra.mxu0 %v363
        %381 = vmatmul.f32.gmra.mxu0 %v314
        %v382 = vpop.f32.mrf.mxu0
        %v383 = vadd.f32 0.0, %v382
        %384 = vmatmul.f32.gmra.mxu0 %v317
        %v385 = vpop.f32.mrf.mxu0
        %v386 = vadd.f32 0.0, %v385
        %387 = vmatmul.f32.gmra.mxu0 %v320
        %v388 = vpop.f32.mrf.mxu0
        %v389 = vadd.f32 0.0, %v388
        %390 = vmatmul.f32.gmra.mxu0 %v323
        %v391 = vpop.f32.mrf.mxu0
        %v392 = vadd.f32 0.0, %v391
        %393 = vmatmul.f32.gmra.mxu0 %v326
        %v394 = vpop.f32.mrf.mxu0
        %v395 = vadd.f32 0.0, %v394
        %396 = vmatmul.f32.gmra.mxu0 %v329
        %v397 = vpop.f32.mrf.mxu0
        %v398 = vadd.f32 0.0, %v397
        %399 = vmatmul.f32.gmra.mxu0 %v332
        %v400 = vpop.f32.mrf.mxu0
        %v401 = vadd.f32 0.0, %v400
        %402 = vmatmul.f32.gmra.mxu0 %v335
        %v403 = vpop.f32.mrf.mxu0
        %v404 = vadd.f32 0.0, %v403
        %405 = vmatmul.f32.gmra.mxu0 %v338
        %v406 = vpop.f32.mrf.mxu0
        %v407 = vadd.f32 0.0, %v406
        %408 = vmatmul.f32.gmra.mxu0 %v341
        %v409 = vpop.f32.mrf.mxu0
        %v410 = vadd.f32 0.0, %v409
        %411 = vmatmul.f32.gmra.mxu0 %v344
        %v412 = vpop.f32.mrf.mxu0
        %v413 = vadd.f32 0.0, %v412
        %414 = vmatmul.f32.gmra.mxu0 %v347
        %v415 = vpop.f32.mrf.mxu0
        %v416 = vadd.f32 0.0, %v415
        %417 = vmatmul.f32.gmra.mxu0 %v350
        %v418 = vpop.f32.mrf.mxu0
        %v419 = vadd.f32 0.0, %v418
        %420 = vmatmul.f32.gmra.mxu0 %v353
        %v421 = vpop.f32.mrf.mxu0
        %v422 = vadd.f32 0.0, %v421
        %423 = vmatmul.f32.gmra.mxu0 %v356
        %v424 = vpop.f32.mrf.mxu0
        %v425 = vadd.f32 0.0, %v424
        %426 = vmatmul.f32.gmra.mxu0 %v359
        %v427 = vpop.f32.mrf.mxu0
        %v428 = vadd.f32 0.0, %v427
        %429 = vdwg.mxu0
        %v431 = vsel %vm312, %v277, 0
        %v434 = vsel %vm312, %v278, 0
        %v437 = vsel %vm312, %v279, 0
        %v440 = vsel %vm312, %v280, 0
        %v443 = vsel %vm312, %v281, 0
        %v446 = vsel %vm312, %v282, 0
        %v449 = vsel %vm312, %v283, 0
        %v452 = vsel %vm312, %v284, 0
        %v455 = vsel %vm312, %v285, 0
        %v458 = vsel %vm312, %v286, 0
        %v461 = vsel %vm312, %v287, 0
        %v464 = vsel %vm312, %v288, 0
        %v467 = vsel %vm312, %v289, 0
        %v470 = vsel %vm312, %v290, 0
        %v473 = vsel %vm312, %v291, 0
        %v476 = vsel %vm312, %v292, 0
        %v479 = vsel %vm361, %v293, 0
        %481 = vmatpush.msra.mxu0 0.0
        %482 = vmatpush.msra.mxu0 0.0
        %483 = vmatpush.msra.mxu0 0.0
        %484 = vmatpush.msra.mxu0 0.0
        %485 = vmatpush.msra.mxu0 0.0
        %486 = vmatpush.msra.mxu0 0.0
        %487 = vmatpush.msra.mxu0 0.0
        %488 = vmatpush.msra.mxu0 0.0
        %489 = vmatpush.msra.mxu0 0.0
        %490 = vmatpush.msra.mxu0 0.0
        %491 = vmatpush.msra.mxu0 0.0
        %492 = vmatpush.msra.mxu0 0.0
        %493 = vmatpush.msra.mxu0 0.0
        %494 = vmatpush.msra.mxu0 0.0
        %495 = vmatpush.msra.mxu0 0.0
        %496 = vmatpush.msra.mxu0 %v479
        %497 = vmatmul.f32.gmra.mxu0 %v431
        %v498 = vpop.f32.mrf.mxu0
        %v499 = vadd.f32 %v383, %v498
        %500 = vmatmul.f32.gmra.mxu0 %v434
        %v501 = vpop.f32.mrf.mxu0
        %v502 = vadd.f32 %v386, %v501
        %503 = vmatmul.f32.gmra.mxu0 %v437
        %v504 = vpop.f32.mrf.mxu0
        %v505 = vadd.f32 %v389, %v504
        %506 = vmatmul.f32.gmra.mxu0 %v440
        %v507 = vpop.f32.mrf.mxu0
        %v508 = vadd.f32 %v392, %v507
        %509 = vmatmul.f32.gmra.mxu0 %v443
        %v510 = vpop.f32.mrf.mxu0
        %v511 = vadd.f32 %v395, %v510
        %512 = vmatmul.f32.gmra.mxu0 %v446
        %v513 = vpop.f32.mrf.mxu0
        %v514 = vadd.f32 %v398, %v513
        %515 = vmatmul.f32.gmra.mxu0 %v449
        %v516 = vpop.f32.mrf.mxu0
        %v517 = vadd.f32 %v401, %v516
        %518 = vmatmul.f32.gmra.mxu0 %v452
        %v519 = vpop.f32.mrf.mxu0
        %v520 = vadd.f32 %v404, %v519
        %521 = vmatmul.f32.gmra.mxu0 %v455
        %v522 = vpop.f32.mrf.mxu0
        %v523 = vadd.f32 %v407, %v522
        %524 = vmatmul.f32.gmra.mxu0 %v458
        %v525 = vpop.f32.mrf.mxu0
        %v526 = vadd.f32 %v410, %v525
        %527 = vmatmul.f32.gmra.mxu0 %v461
        %v528 = vpop.f32.mrf.mxu0
        %v529 = vadd.f32 %v413, %v528
        %530 = vmatmul.f32.gmra.mxu0 %v464
        %v531 = vpop.f32.mrf.mxu0
        %v532 = vadd.f32 %v416, %v531
        %533 = vmatmul.f32.gmra.mxu0 %v467
        %v534 = vpop.f32.mrf.mxu0
        %v535 = vadd.f32 %v419, %v534
        %536 = vmatmul.f32.gmra.mxu0 %v470
        %v537 = vpop.f32.mrf.mxu0
        %v538 = vadd.f32 %v422, %v537
        %539 = vmatmul.f32.gmra.mxu0 %v473
        %v540 = vpop.f32.mrf.mxu0
        %v541 = vadd.f32 %v425, %v540
        %542 = vmatmul.f32.gmra.mxu0 %v476
        %v543 = vpop.f32.mrf.mxu0
        %v544 = vadd.f32 %v428, %v543
        %545 = vdwg.mxu0
        %v546 = vld [vmem:[%s276 + $0x4] sm:$0xff]
        %v547 = vld [vmem:[%s276 + $0xc] sm:$0xff]
        %v548 = vld [vmem:[%s276 + $0x14] sm:$0xff]
        %v549 = vld [vmem:[%s276 + $0x1c] sm:$0xff]
        %v550 = vld [vmem:[%s276 + $0x24] sm:$0xff]
        %v551 = vld [vmem:[%s276 + $0x2c] sm:$0xff]
        %v552 = vld [vmem:[%s276 + $0x34] sm:$0xff]
        %v553 = vld [vmem:[%s276 + $0x3c] sm:$0xff]
        %v554 = vld [vmem:[%s276 + $0x44] sm:$0xff]
        %v555 = vld [vmem:[%s276 + $0x4c] sm:$0xff]
        %v556 = vld [vmem:[%s276 + $0x54] sm:$0xff]
        %v557 = vld [vmem:[%s276 + $0x5c] sm:$0xff]
        %v558 = vld [vmem:[%s276 + $0x64] sm:$0xff]
        %v559 = vld [vmem:[%s276 + $0x6c] sm:$0xff]
        %v560 = vld [vmem:[%s276 + $0x74] sm:$0xff]
        %v561 = vld [vmem:[%s276 + $0x7c] sm:$0xff]
        %s562 = scalar_lea.vmem %s1, 8
        %v563 = vld [vmem:[%s562] sm:$0xf]
        %v565 = vsel %vm312, %v546, 0
        %v568 = vsel %vm312, %v547, 0
        %v571 = vsel %vm312, %v548, 0
        %v574 = vsel %vm312, %v549, 0
        %v577 = vsel %vm312, %v550, 0
        %v580 = vsel %vm312, %v551, 0
        %v583 = vsel %vm312, %v552, 0
        %v586 = vsel %vm312, %v553, 0
        %v589 = vsel %vm312, %v554, 0
        %v592 = vsel %vm312, %v555, 0
        %v595 = vsel %vm312, %v556, 0
        %v598 = vsel %vm312, %v557, 0
        %v601 = vsel %vm312, %v558, 0
        %v604 = vsel %vm312, %v559, 0
        %v607 = vsel %vm312, %v560, 0
        %v610 = vsel %vm312, %v561, 0
        %v613 = vsel %vm361, %v563, 0
        %615 = vmatpush.msra.mxu0 0.0
        %616 = vmatpush.msra.mxu0 0.0
        %617 = vmatpush.msra.mxu0 0.0
        %618 = vmatpush.msra.mxu0 0.0
        %619 = vmatpush.msra.mxu0 0.0
        %620 = vmatpush.msra.mxu0 0.0
        %621 = vmatpush.msra.mxu0 0.0
        %622 = vmatpush.msra.mxu0 0.0
        %623 = vmatpush.msra.mxu0 0.0
        %624 = vmatpush.msra.mxu0 0.0
        %625 = vmatpush.msra.mxu0 0.0
        %626 = vmatpush.msra.mxu0 0.0
        %627 = vmatpush.msra.mxu0 0.0
        %628 = vmatpush.msra.mxu0 0.0
        %629 = vmatpush.msra.mxu0 0.0
        %630 = vmatpush.msra.mxu0 %v613
        %631 = vmatmul.f32.gmra.mxu0 %v565
        %v632 = vpop.f32.mrf.mxu0
        %v633 = vadd.f32 0.0, %v632
        %634 = vmatmul.f32.gmra.mxu0 %v568
        %v635 = vpop.f32.mrf.mxu0
        %v636 = vadd.f32 0.0, %v635
        %637 = vmatmul.f32.gmra.mxu0 %v571
        %v638 = vpop.f32.mrf.mxu0
        %v639 = vadd.f32 0.0, %v638
        %640 = vmatmul.f32.gmra.mxu0 %v574
        %v641 = vpop.f32.mrf.mxu0
        %v642 = vadd.f32 0.0, %v641
        %643 = vmatmul.f32.gmra.mxu0 %v577
        %v644 = vpop.f32.mrf.mxu0
        %v645 = vadd.f32 0.0, %v644
        %646 = vmatmul.f32.gmra.mxu0 %v580
        %v647 = vpop.f32.mrf.mxu0
        %v648 = vadd.f32 0.0, %v647
        %649 = vmatmul.f32.gmra.mxu0 %v583
        %v650 = vpop.f32.mrf.mxu0
        %v651 = vadd.f32 0.0, %v650
        %652 = vmatmul.f32.gmra.mxu0 %v586
        %v653 = vpop.f32.mrf.mxu0
        %v654 = vadd.f32 0.0, %v653
        %655 = vmatmul.f32.gmra.mxu0 %v589
        %v656 = vpop.f32.mrf.mxu0
        %v657 = vadd.f32 0.0, %v656
        %658 = vmatmul.f32.gmra.mxu0 %v592
        %v659 = vpop.f32.mrf.mxu0
        %v660 = vadd.f32 0.0, %v659
        %661 = vmatmul.f32.gmra.mxu0 %v595
        %v662 = vpop.f32.mrf.mxu0
        %v663 = vadd.f32 0.0, %v662
        %664 = vmatmul.f32.gmra.mxu0 %v598
        %v665 = vpop.f32.mrf.mxu0
        %v666 = vadd.f32 0.0, %v665
        %667 = vmatmul.f32.gmra.mxu0 %v601
        %v668 = vpop.f32.mrf.mxu0
        %v669 = vadd.f32 0.0, %v668
        %670 = vmatmul.f32.gmra.mxu0 %v604
        %v671 = vpop.f32.mrf.mxu0
        %v672 = vadd.f32 0.0, %v671
        %673 = vmatmul.f32.gmra.mxu0 %v607
        %v674 = vpop.f32.mrf.mxu0
        %v675 = vadd.f32 0.0, %v674
        %676 = vmatmul.f32.gmra.mxu0 %v610
        %v677 = vpop.f32.mrf.mxu0
        %v678 = vadd.f32 0.0, %v677
        %679 = vdwg.mxu0
        %v680 = vadd.f32 %v499, %v633
        %v681 = vadd.f32 %v502, %v636
        %v682 = vadd.f32 %v505, %v639
        %v683 = vadd.f32 %v508, %v642
        %v684 = vadd.f32 %v511, %v645
        %v685 = vadd.f32 %v514, %v648
        %v686 = vadd.f32 %v517, %v651
        %v687 = vadd.f32 %v520, %v654
        %v688 = vadd.f32 %v523, %v657
        %v689 = vadd.f32 %v526, %v660
        %v690 = vadd.f32 %v529, %v663
        %v691 = vadd.f32 %v532, %v666
        %v692 = vadd.f32 %v535, %v669
        %v693 = vadd.f32 %v538, %v672
        %v694 = vadd.f32 %v541, %v675
        %v695 = vadd.f32 %v544, %v678
        %v696 = vld [vmem:[%s2] sm:$0x1]
        %v698 = vperm.slane %v696, 0
        %v700 = vadd.f32 %v680, %v698
        %v701 = vadd.f32 %v681, %v698
        %v702 = vadd.f32 %v682, %v698
        %v703 = vadd.f32 %v683, %v698
        %v704 = vadd.f32 %v684, %v698
        %v705 = vadd.f32 %v685, %v698
        %v706 = vadd.f32 %v686, %v698
        %v707 = vadd.f32 %v687, %v698
        %v708 = vadd.f32 %v688, %v698
        %v709 = vadd.f32 %v689, %v698
        %v710 = vadd.f32 %v690, %v698
        %v711 = vadd.f32 %v691, %v698
        %v712 = vadd.f32 %v692, %v698
        %v713 = vadd.f32 %v693, %v698
        %v714 = vadd.f32 %v694, %v698
        %v715 = vadd.f32 %v695, %v698
        %v716 = vmax.f32 %v700, 0.0
        %v717 = vmax.f32 %v701, 0.0
        %v718 = vmax.f32 %v702, 0.0
        %v719 = vmax.f32 %v703, 0.0
        %v720 = vmax.f32 %v704, 0.0
        %v721 = vmax.f32 %v705, 0.0
        %v722 = vmax.f32 %v706, 0.0
        %v723 = vmax.f32 %v707, 0.0
        %v724 = vmax.f32 %v708, 0.0
        %v725 = vmax.f32 %v709, 0.0
        %v726 = vmax.f32 %v710, 0.0
        %v727 = vmax.f32 %v711, 0.0
        %v728 = vmax.f32 %v712, 0.0
        %v729 = vmax.f32 %v713, 0.0
        %v730 = vmax.f32 %v714, 0.0
        %v731 = vmax.f32 %v715, 0.0
        %v732 = vld [vmem:[%s276 + $0x1] sm:$0xff]
        %v733 = vld [vmem:[%s276 + $0x9] sm:$0xff]
        %v734 = vld [vmem:[%s276 + $0x11] sm:$0xff]
        %v735 = vld [vmem:[%s276 + $0x19] sm:$0xff]
        %v736 = vld [vmem:[%s276 + $0x21] sm:$0xff]
        %v737 = vld [vmem:[%s276 + $0x29] sm:$0xff]
        %v738 = vld [vmem:[%s276 + $0x31] sm:$0xff]
        %v739 = vld [vmem:[%s276 + $0x39] sm:$0xff]
        %v740 = vld [vmem:[%s276 + $0x41] sm:$0xff]
        %v741 = vld [vmem:[%s276 + $0x49] sm:$0xff]
        %v742 = vld [vmem:[%s276 + $0x51] sm:$0xff]
        %v743 = vld [vmem:[%s276 + $0x59] sm:$0xff]
        %v744 = vld [vmem:[%s276 + $0x61] sm:$0xff]
        %v745 = vld [vmem:[%s276 + $0x69] sm:$0xff]
        %v746 = vld [vmem:[%s276 + $0x71] sm:$0xff]
        %v747 = vld [vmem:[%s276 + $0x79] sm:$0xff]
        %v748 = vld [vmem:[%s3] sm:$0xf]
        %s749 = scalar_lea.vmem %s3, 4
        %v750 = vld [vmem:[%s749] sm:$0xf]
        %v752 = vsel %vm361, %v750, 0
        %754 = vmatpush.msra.mxu0 0.0
        %755 = vmatpush.msra.mxu0 0.0
        %756 = vmatpush.msra.mxu0 0.0
        %757 = vmatpush.msra.mxu0 0.0
        %758 = vmatpush.msra.mxu0 0.0
        %759 = vmatpush.msra.mxu0 0.0
        %760 = vmatpush.msra.mxu0 0.0
        %761 = vmatpush.msra.mxu0 0.0
        %762 = vmatpush.msra.mxu0 0.0
        %763 = vmatpush.msra.mxu0 0.0
        %764 = vmatpush.msra.mxu0 0.0
        %765 = vmatpush.msra.mxu0 0.0
        %766 = vmatpush.msra.mxu0 0.0
        %767 = vmatpush.msra.mxu0 0.0
        %768 = vmatpush.msra.mxu0 0.0
        %769 = vmatpush.msra.mxu0 %v752
        %770 = vmatmul.f32.gmra.mxu0 %v431
        %v771 = vpop.f32.mrf.mxu0
        %v772 = vadd.f32 0.0, %v771
        %773 = vmatmul.f32.gmra.mxu0 %v434
        %v774 = vpop.f32.mrf.mxu0
        %v775 = vadd.f32 0.0, %v774
        %776 = vmatmul.f32.gmra.mxu0 %v437
        %v777 = vpop.f32.mrf.mxu0
        %v778 = vadd.f32 0.0, %v777
        %779 = vmatmul.f32.gmra.mxu0 %v440
        %v780 = vpop.f32.mrf.mxu0
        %v781 = vadd.f32 0.0, %v780
        %782 = vmatmul.f32.gmra.mxu0 %v443
        %v783 = vpop.f32.mrf.mxu0
        %v784 = vadd.f32 0.0, %v783
        %785 = vmatmul.f32.gmra.mxu0 %v446
        %v786 = vpop.f32.mrf.mxu0
        %v787 = vadd.f32 0.0, %v786
        %788 = vmatmul.f32.gmra.mxu0 %v449
        %v789 = vpop.f32.mrf.mxu0
        %v790 = vadd.f32 0.0, %v789
        %791 = vmatmul.f32.gmra.mxu0 %v452
        %v792 = vpop.f32.mrf.mxu0
        %v793 = vadd.f32 0.0, %v792
        %794 = vmatmul.f32.gmra.mxu0 %v455
        %v795 = vpop.f32.mrf.mxu0
        %v796 = vadd.f32 0.0, %v795
        %797 = vmatmul.f32.gmra.mxu0 %v458
        %v798 = vpop.f32.mrf.mxu0
        %v799 = vadd.f32 0.0, %v798
        %800 = vmatmul.f32.gmra.mxu0 %v461
        %v801 = vpop.f32.mrf.mxu0
        %v802 = vadd.f32 0.0, %v801
        %803 = vmatmul.f32.gmra.mxu0 %v464
        %v804 = vpop.f32.mrf.mxu0
        %v805 = vadd.f32 0.0, %v804
        %806 = vmatmul.f32.gmra.mxu0 %v467
        %v807 = vpop.f32.mrf.mxu0
        %v808 = vadd.f32 0.0, %v807
        %809 = vmatmul.f32.gmra.mxu0 %v470
        %v810 = vpop.f32.mrf.mxu0
        %v811 = vadd.f32 0.0, %v810
        %812 = vmatmul.f32.gmra.mxu0 %v473
        %v813 = vpop.f32.mrf.mxu0
        %v814 = vadd.f32 0.0, %v813
        %815 = vmatmul.f32.gmra.mxu0 %v476
        %v816 = vpop.f32.mrf.mxu0
        %v817 = vadd.f32 0.0, %v816
        %818 = vdwg.mxu0
        %v820 = vsel %vm312, %v732, 0
        %v823 = vsel %vm312, %v733, 0
        %v826 = vsel %vm312, %v734, 0
        %v829 = vsel %vm312, %v735, 0
        %v832 = vsel %vm312, %v736, 0
        %v835 = vsel %vm312, %v737, 0
        %v838 = vsel %vm312, %v738, 0
        %v841 = vsel %vm312, %v739, 0
        %v844 = vsel %vm312, %v740, 0
        %v847 = vsel %vm312, %v741, 0
        %v850 = vsel %vm312, %v742, 0
        %v853 = vsel %vm312, %v743, 0
        %v856 = vsel %vm312, %v744, 0
        %v859 = vsel %vm312, %v745, 0
        %v862 = vsel %vm312, %v746, 0
        %v865 = vsel %vm312, %v747, 0
        %v868 = vsel %vm361, %v748, 0
        %870 = vmatpush.msra.mxu0 0.0
        %871 = vmatpush.msra.mxu0 0.0
        %872 = vmatpush.msra.mxu0 0.0
        %873 = vmatpush.msra.mxu0 0.0
        %874 = vmatpush.msra.mxu0 0.0
        %875 = vmatpush.msra.mxu0 0.0
        %876 = vmatpush.msra.mxu0 0.0
        %877 = vmatpush.msra.mxu0 0.0
        %878 = vmatpush.msra.mxu0 0.0
        %879 = vmatpush.msra.mxu0 0.0
        %880 = vmatpush.msra.mxu0 0.0
        %881 = vmatpush.msra.mxu0 0.0
        %882 = vmatpush.msra.mxu0 0.0
        %883 = vmatpush.msra.mxu0 0.0
        %884 = vmatpush.msra.mxu0 0.0
        %885 = vmatpush.msra.mxu0 %v868
        %886 = vmatmul.f32.gmra.mxu0 %v820
        %v887 = vpop.f32.mrf.mxu0
        %v888 = vadd.f32 %v772, %v887
        %889 = vmatmul.f32.gmra.mxu0 %v823
        %v890 = vpop.f32.mrf.mxu0
        %v891 = vadd.f32 %v775, %v890
        %892 = vmatmul.f32.gmra.mxu0 %v826
        %v893 = vpop.f32.mrf.mxu0
        %v894 = vadd.f32 %v778, %v893
        %895 = vmatmul.f32.gmra.mxu0 %v829
        %v896 = vpop.f32.mrf.mxu0
        %v897 = vadd.f32 %v781, %v896
        %898 = vmatmul.f32.gmra.mxu0 %v832
        %v899 = vpop.f32.mrf.mxu0
        %v900 = vadd.f32 %v784, %v899
        %901 = vmatmul.f32.gmra.mxu0 %v835
        %v902 = vpop.f32.mrf.mxu0
        %v903 = vadd.f32 %v787, %v902
        %904 = vmatmul.f32.gmra.mxu0 %v838
        %v905 = vpop.f32.mrf.mxu0
        %v906 = vadd.f32 %v790, %v905
        %907 = vmatmul.f32.gmra.mxu0 %v841
        %v908 = vpop.f32.mrf.mxu0
        %v909 = vadd.f32 %v793, %v908
        %910 = vmatmul.f32.gmra.mxu0 %v844
        %v911 = vpop.f32.mrf.mxu0
        %v912 = vadd.f32 %v796, %v911
        %913 = vmatmul.f32.gmra.mxu0 %v847
        %v914 = vpop.f32.mrf.mxu0
        %v915 = vadd.f32 %v799, %v914
        %916 = vmatmul.f32.gmra.mxu0 %v850
        %v917 = vpop.f32.mrf.mxu0
        %v918 = vadd.f32 %v802, %v917
        %919 = vmatmul.f32.gmra.mxu0 %v853
        %v920 = vpop.f32.mrf.mxu0
        %v921 = vadd.f32 %v805, %v920
        %922 = vmatmul.f32.gmra.mxu0 %v856
        %v923 = vpop.f32.mrf.mxu0
        %v924 = vadd.f32 %v808, %v923
        %925 = vmatmul.f32.gmra.mxu0 %v859
        %v926 = vpop.f32.mrf.mxu0
        %v927 = vadd.f32 %v811, %v926
        %928 = vmatmul.f32.gmra.mxu0 %v862
        %v929 = vpop.f32.mrf.mxu0
        %v930 = vadd.f32 %v814, %v929
        %931 = vmatmul.f32.gmra.mxu0 %v865
        %v932 = vpop.f32.mrf.mxu0
        %v933 = vadd.f32 %v817, %v932
        %934 = vdwg.mxu0
        %s935 = scalar_lea.vmem %s3, 8
        %v936 = vld [vmem:[%s935] sm:$0xf]
        %v938 = vsel %vm361, %v936, 0
        %940 = vmatpush.msra.mxu0 0.0
        %941 = vmatpush.msra.mxu0 0.0
        %942 = vmatpush.msra.mxu0 0.0
        %943 = vmatpush.msra.mxu0 0.0
        %944 = vmatpush.msra.mxu0 0.0
        %945 = vmatpush.msra.mxu0 0.0
        %946 = vmatpush.msra.mxu0 0.0
        %947 = vmatpush.msra.mxu0 0.0
        %948 = vmatpush.msra.mxu0 0.0
        %949 = vmatpush.msra.mxu0 0.0
        %950 = vmatpush.msra.mxu0 0.0
        %951 = vmatpush.msra.mxu0 0.0
        %952 = vmatpush.msra.mxu0 0.0
        %953 = vmatpush.msra.mxu0 0.0
        %954 = vmatpush.msra.mxu0 0.0
        %955 = vmatpush.msra.mxu0 %v938
        %956 = vmatmul.f32.gmra.mxu0 %v314
        %v957 = vpop.f32.mrf.mxu0
        %v958 = vadd.f32 0.0, %v957
        %959 = vmatmul.f32.gmra.mxu0 %v317
        %v960 = vpop.f32.mrf.mxu0
        %v961 = vadd.f32 0.0, %v960
        %962 = vmatmul.f32.gmra.mxu0 %v320
        %v963 = vpop.f32.mrf.mxu0
        %v964 = vadd.f32 0.0, %v963
        %965 = vmatmul.f32.gmra.mxu0 %v323
        %v966 = vpop.f32.mrf.mxu0
        %v967 = vadd.f32 0.0, %v966
        %968 = vmatmul.f32.gmra.mxu0 %v326
        %v969 = vpop.f32.mrf.mxu0
        %v970 = vadd.f32 0.0, %v969
        %971 = vmatmul.f32.gmra.mxu0 %v329
        %v972 = vpop.f32.mrf.mxu0
        %v973 = vadd.f32 0.0, %v972
        %974 = vmatmul.f32.gmra.mxu0 %v332
        %v975 = vpop.f32.mrf.mxu0
        %v976 = vadd.f32 0.0, %v975
        %977 = vmatmul.f32.gmra.mxu0 %v335
        %v978 = vpop.f32.mrf.mxu0
        %v979 = vadd.f32 0.0, %v978
        %980 = vmatmul.f32.gmra.mxu0 %v338
        %v981 = vpop.f32.mrf.mxu0
        %v982 = vadd.f32 0.0, %v981
        %983 = vmatmul.f32.gmra.mxu0 %v341
        %v984 = vpop.f32.mrf.mxu0
        %v985 = vadd.f32 0.0, %v984
        %986 = vmatmul.f32.gmra.mxu0 %v344
        %v987 = vpop.f32.mrf.mxu0
        %v988 = vadd.f32 0.0, %v987
        %989 = vmatmul.f32.gmra.mxu0 %v347
        %v990 = vpop.f32.mrf.mxu0
        %v991 = vadd.f32 0.0, %v990
        %992 = vmatmul.f32.gmra.mxu0 %v350
        %v993 = vpop.f32.mrf.mxu0
        %v994 = vadd.f32 0.0, %v993
        %995 = vmatmul.f32.gmra.mxu0 %v353
        %v996 = vpop.f32.mrf.mxu0
        %v997 = vadd.f32 0.0, %v996
        %998 = vmatmul.f32.gmra.mxu0 %v356
        %v999 = vpop.f32.mrf.mxu0
        %v1000 = vadd.f32 0.0, %v999
        %1001 = vmatmul.f32.gmra.mxu0 %v359
        %v1002 = vpop.f32.mrf.mxu0
        %v1003 = vadd.f32 0.0, %v1002
        %1004 = vdwg.mxu0
        %v1005 = vadd.f32 %v888, %v958
        %v1006 = vadd.f32 %v891, %v961
        %v1007 = vadd.f32 %v894, %v964
        %v1008 = vadd.f32 %v897, %v967
        %v1009 = vadd.f32 %v900, %v970
        %v1010 = vadd.f32 %v903, %v973
        %v1011 = vadd.f32 %v906, %v976
        %v1012 = vadd.f32 %v909, %v979
        %v1013 = vadd.f32 %v912, %v982
        %v1014 = vadd.f32 %v915, %v985
        %v1015 = vadd.f32 %v918, %v988
        %v1016 = vadd.f32 %v921, %v991
        %v1017 = vadd.f32 %v924, %v994
        %v1018 = vadd.f32 %v927, %v997
        %v1019 = vadd.f32 %v930, %v1000
        %v1020 = vadd.f32 %v933, %v1003
        %s1021 = scalar_lea.vmem %s3, 12
        %v1022 = vld [vmem:[%s1021] sm:$0xf]
        %v1024 = vsel %vm361, %v1022, 0
        %1026 = vmatpush.msra.mxu0 0.0
        %1027 = vmatpush.msra.mxu0 0.0
        %1028 = vmatpush.msra.mxu0 0.0
        %1029 = vmatpush.msra.mxu0 0.0
        %1030 = vmatpush.msra.mxu0 0.0
        %1031 = vmatpush.msra.mxu0 0.0
        %1032 = vmatpush.msra.mxu0 0.0
        %1033 = vmatpush.msra.mxu0 0.0
        %1034 = vmatpush.msra.mxu0 0.0
        %1035 = vmatpush.msra.mxu0 0.0
        %1036 = vmatpush.msra.mxu0 0.0
        %1037 = vmatpush.msra.mxu0 0.0
        %1038 = vmatpush.msra.mxu0 0.0
        %1039 = vmatpush.msra.mxu0 0.0
        %1040 = vmatpush.msra.mxu0 0.0
        %1041 = vmatpush.msra.mxu0 %v1024
        %1042 = vmatmul.f32.gmra.mxu0 %v565
        %v1043 = vpop.f32.mrf.mxu0
        %v1044 = vadd.f32 0.0, %v1043
        %1045 = vmatmul.f32.gmra.mxu0 %v568
        %v1046 = vpop.f32.mrf.mxu0
        %v1047 = vadd.f32 0.0, %v1046
        %1048 = vmatmul.f32.gmra.mxu0 %v571
        %v1049 = vpop.f32.mrf.mxu0
        %v1050 = vadd.f32 0.0, %v1049
        %1051 = vmatmul.f32.gmra.mxu0 %v574
        %v1052 = vpop.f32.mrf.mxu0
        %v1053 = vadd.f32 0.0, %v1052
        %1054 = vmatmul.f32.gmra.mxu0 %v577
        %v1055 = vpop.f32.mrf.mxu0
        %v1056 = vadd.f32 0.0, %v1055
        %1057 = vmatmul.f32.gmra.mxu0 %v580
        %v1058 = vpop.f32.mrf.mxu0
        %v1059 = vadd.f32 0.0, %v1058
        %1060 = vmatmul.f32.gmra.mxu0 %v583
        %v1061 = vpop.f32.mrf.mxu0
        %v1062 = vadd.f32 0.0, %v1061
        %1063 = vmatmul.f32.gmra.mxu0 %v586
        %v1064 = vpop.f32.mrf.mxu0
        %v1065 = vadd.f32 0.0, %v1064
        %1066 = vmatmul.f32.gmra.mxu0 %v589
        %v1067 = vpop.f32.mrf.mxu0
        %v1068 = vadd.f32 0.0, %v1067
        %1069 = vmatmul.f32.gmra.mxu0 %v592
        %v1070 = vpop.f32.mrf.mxu0
        %v1071 = vadd.f32 0.0, %v1070
        %1072 = vmatmul.f32.gmra.mxu0 %v595
        %v1073 = vpop.f32.mrf.mxu0
        %v1074 = vadd.f32 0.0, %v1073
        %1075 = vmatmul.f32.gmra.mxu0 %v598
        %v1076 = vpop.f32.mrf.mxu0
        %v1077 = vadd.f32 0.0, %v1076
        %1078 = vmatmul.f32.gmra.mxu0 %v601
        %v1079 = vpop.f32.mrf.mxu0
        %v1080 = vadd.f32 0.0, %v1079
        %1081 = vmatmul.f32.gmra.mxu0 %v604
        %v1082 = vpop.f32.mrf.mxu0
        %v1083 = vadd.f32 0.0, %v1082
        %1084 = vmatmul.f32.gmra.mxu0 %v607
        %v1085 = vpop.f32.mrf.mxu0
        %v1086 = vadd.f32 0.0, %v1085
        %1087 = vmatmul.f32.gmra.mxu0 %v610
        %v1088 = vpop.f32.mrf.mxu0
        %v1089 = vadd.f32 0.0, %v1088
        %1090 = vdwg.mxu0
        %v1091 = vadd.f32 %v1005, %v1044
        %v1092 = vadd.f32 %v1006, %v1047
        %v1093 = vadd.f32 %v1007, %v1050
        %v1094 = vadd.f32 %v1008, %v1053
        %v1095 = vadd.f32 %v1009, %v1056
        %v1096 = vadd.f32 %v1010, %v1059
        %v1097 = vadd.f32 %v1011, %v1062
        %v1098 = vadd.f32 %v1012, %v1065
        %v1099 = vadd.f32 %v1013, %v1068
        %v1100 = vadd.f32 %v1014, %v1071
        %v1101 = vadd.f32 %v1015, %v1074
        %v1102 = vadd.f32 %v1016, %v1077
        %v1103 = vadd.f32 %v1017, %v1080
        %v1104 = vadd.f32 %v1018, %v1083
        %v1105 = vadd.f32 %v1019, %v1086
        %v1106 = vadd.f32 %v1020, %v1089
        %v1107 = vld [vmem:[%s276 + $0x5] sm:$0xff]
        %v1108 = vld [vmem:[%s276 + $0xd] sm:$0xff]
        %v1109 = vld [vmem:[%s276 + $0x15] sm:$0xff]
        %v1110 = vld [vmem:[%s276 + $0x1d] sm:$0xff]
        %v1111 = vld [vmem:[%s276 + $0x25] sm:$0xff]
        %v1112 = vld [vmem:[%s276 + $0x2d] sm:$0xff]
        %v1113 = vld [vmem:[%s276 + $0x35] sm:$0xff]
        %v1114 = vld [vmem:[%s276 + $0x3d] sm:$0xff]
        %v1115 = vld [vmem:[%s276 + $0x45] sm:$0xff]
        %v1116 = vld [vmem:[%s276 + $0x4d] sm:$0xff]
        %v1117 = vld [vmem:[%s276 + $0x55] sm:$0xff]
        %v1118 = vld [vmem:[%s276 + $0x5d] sm:$0xff]
        %v1119 = vld [vmem:[%s276 + $0x65] sm:$0xff]
        %v1120 = vld [vmem:[%s276 + $0x6d] sm:$0xff]
        %v1121 = vld [vmem:[%s276 + $0x75] sm:$0xff]
        %v1122 = vld [vmem:[%s276 + $0x7d] sm:$0xff]
        %s1123 = scalar_lea.vmem %s3, 16
        %v1124 = vld [vmem:[%s1123] sm:$0xf]
        %v1126 = vsel %vm312, %v1107, 0
        %v1129 = vsel %vm312, %v1108, 0
        %v1132 = vsel %vm312, %v1109, 0
        %v1135 = vsel %vm312, %v1110, 0
        %v1138 = vsel %vm312, %v1111, 0
        %v1141 = vsel %vm312, %v1112, 0
        %v1144 = vsel %vm312, %v1113, 0
        %v1147 = vsel %vm312, %v1114, 0
        %v1150 = vsel %vm312, %v1115, 0
        %v1153 = vsel %vm312, %v1116, 0
        %v1156 = vsel %vm312, %v1117, 0
        %v1159 = vsel %vm312, %v1118, 0
        %v1162 = vsel %vm312, %v1119, 0
        %v1165 = vsel %vm312, %v1120, 0
        %v1168 = vsel %vm312, %v1121, 0
        %v1171 = vsel %vm312, %v1122, 0
        %v1174 = vsel %vm361, %v1124, 0
        %1176 = vmatpush.msra.mxu0 0.0
        %1177 = vmatpush.msra.mxu0 0.0
        %1178 = vmatpush.msra.mxu0 0.0
        %1179 = vmatpush.msra.mxu0 0.0
        %1180 = vmatpush.msra.mxu0 0.0
        %1181 = vmatpush.msra.mxu0 0.0
        %1182 = vmatpush.msra.mxu0 0.0
        %1183 = vmatpush.msra.mxu0 0.0
        %1184 = vmatpush.msra.mxu0 0.0
        %1185 = vmatpush.msra.mxu0 0.0
        %1186 = vmatpush.msra.mxu0 0.0
        %1187 = vmatpush.msra.mxu0 0.0
        %1188 = vmatpush.msra.mxu0 0.0
        %1189 = vmatpush.msra.mxu0 0.0
        %1190 = vmatpush.msra.mxu0 0.0
        %1191 = vmatpush.msra.mxu0 %v1174
        %1192 = vmatmul.f32.gmra.mxu0 %v1126
        %v1193 = vpop.f32.mrf.mxu0
        %v1194 = vadd.f32 0.0, %v1193
        %1195 = vmatmul.f32.gmra.mxu0 %v1129
        %v1196 = vpop.f32.mrf.mxu0
        %v1197 = vadd.f32 0.0, %v1196
        %1198 = vmatmul.f32.gmra.mxu0 %v1132
        %v1199 = vpop.f32.mrf.mxu0
        %v1200 = vadd.f32 0.0, %v1199
        %1201 = vmatmul.f32.gmra.mxu0 %v1135
        %v1202 = vpop.f32.mrf.mxu0
        %v1203 = vadd.f32 0.0, %v1202
        %1204 = vmatmul.f32.gmra.mxu0 %v1138
        %v1205 = vpop.f32.mrf.mxu0
        %v1206 = vadd.f32 0.0, %v1205
        %1207 = vmatmul.f32.gmra.mxu0 %v1141
        %v1208 = vpop.f32.mrf.mxu0
        %v1209 = vadd.f32 0.0, %v1208
        %1210 = vmatmul.f32.gmra.mxu0 %v1144
        %v1211 = vpop.f32.mrf.mxu0
        %v1212 = vadd.f32 0.0, %v1211
        %1213 = vmatmul.f32.gmra.mxu0 %v1147
        %v1214 = vpop.f32.mrf.mxu0
        %v1215 = vadd.f32 0.0, %v1214
        %1216 = vmatmul.f32.gmra.mxu0 %v1150
        %v1217 = vpop.f32.mrf.mxu0
        %v1218 = vadd.f32 0.0, %v1217
        %1219 = vmatmul.f32.gmra.mxu0 %v1153
        %v1220 = vpop.f32.mrf.mxu0
        %v1221 = vadd.f32 0.0, %v1220
        %1222 = vmatmul.f32.gmra.mxu0 %v1156
        %v1223 = vpop.f32.mrf.mxu0
        %v1224 = vadd.f32 0.0, %v1223
        %1225 = vmatmul.f32.gmra.mxu0 %v1159
        %v1226 = vpop.f32.mrf.mxu0
        %v1227 = vadd.f32 0.0, %v1226
        %1228 = vmatmul.f32.gmra.mxu0 %v1162
        %v1229 = vpop.f32.mrf.mxu0
        %v1230 = vadd.f32 0.0, %v1229
        %1231 = vmatmul.f32.gmra.mxu0 %v1165
        %v1232 = vpop.f32.mrf.mxu0
        %v1233 = vadd.f32 0.0, %v1232
        %1234 = vmatmul.f32.gmra.mxu0 %v1168
        %v1235 = vpop.f32.mrf.mxu0
        %v1236 = vadd.f32 0.0, %v1235
        %1237 = vmatmul.f32.gmra.mxu0 %v1171
        %v1238 = vpop.f32.mrf.mxu0
        %v1239 = vadd.f32 0.0, %v1238
        %1240 = vdwg.mxu0
        %v1241 = vadd.f32 %v1091, %v1194
        %v1242 = vadd.f32 %v1092, %v1197
        %v1243 = vadd.f32 %v1093, %v1200
        %v1244 = vadd.f32 %v1094, %v1203
        %v1245 = vadd.f32 %v1095, %v1206
        %v1246 = vadd.f32 %v1096, %v1209
        %v1247 = vadd.f32 %v1097, %v1212
        %v1248 = vadd.f32 %v1098, %v1215
        %v1249 = vadd.f32 %v1099, %v1218
        %v1250 = vadd.f32 %v1100, %v1221
        %v1251 = vadd.f32 %v1101, %v1224
        %v1252 = vadd.f32 %v1102, %v1227
        %v1253 = vadd.f32 %v1103, %v1230
        %v1254 = vadd.f32 %v1104, %v1233
        %v1255 = vadd.f32 %v1105, %v1236
        %v1256 = vadd.f32 %v1106, %v1239
        %v1257 = vld [vmem:[%s4] sm:$0x1]
        %v1259 = vperm.slane %v1257, 0
        %v1261 = vadd.f32 %v1241, %v1259
        %v1262 = vadd.f32 %v1242, %v1259
        %v1263 = vadd.f32 %v1243, %v1259
        %v1264 = vadd.f32 %v1244, %v1259
        %v1265 = vadd.f32 %v1245, %v1259
        %v1266 = vadd.f32 %v1246, %v1259
        %v1267 = vadd.f32 %v1247, %v1259
        %v1268 = vadd.f32 %v1248, %v1259
        %v1269 = vadd.f32 %v1249, %v1259
        %v1270 = vadd.f32 %v1250, %v1259
        %v1271 = vadd.f32 %v1251, %v1259
        %v1272 = vadd.f32 %v1252, %v1259
        %v1273 = vadd.f32 %v1253, %v1259
        %v1274 = vadd.f32 %v1254, %v1259
        %v1275 = vadd.f32 %v1255, %v1259
        %v1276 = vadd.f32 %v1256, %v1259
        %v1277 = vmax.f32 %v1261, 0.0
        %v1278 = vmax.f32 %v1262, 0.0
        %v1279 = vmax.f32 %v1263, 0.0
        %v1280 = vmax.f32 %v1264, 0.0
        %v1281 = vmax.f32 %v1265, 0.0
        %v1282 = vmax.f32 %v1266, 0.0
        %v1283 = vmax.f32 %v1267, 0.0
        %v1284 = vmax.f32 %v1268, 0.0
        %v1285 = vmax.f32 %v1269, 0.0
        %v1286 = vmax.f32 %v1270, 0.0
        %v1287 = vmax.f32 %v1271, 0.0
        %v1288 = vmax.f32 %v1272, 0.0
        %v1289 = vmax.f32 %v1273, 0.0
        %v1290 = vmax.f32 %v1274, 0.0
        %v1291 = vmax.f32 %v1275, 0.0
        %v1292 = vmax.f32 %v1276, 0.0
        %v1293 = vld [vmem:[%s276] sm:$0xff]
        %v1294 = vld [vmem:[%s276 + $0x8] sm:$0xff]
        %v1295 = vld [vmem:[%s276 + $0x10] sm:$0xff]
        %v1296 = vld [vmem:[%s276 + $0x18] sm:$0xff]
        %v1297 = vld [vmem:[%s276 + $0x20] sm:$0xff]
        %v1298 = vld [vmem:[%s276 + $0x28] sm:$0xff]
        %v1299 = vld [vmem:[%s276 + $0x30] sm:$0xff]
        %v1300 = vld [vmem:[%s276 + $0x38] sm:$0xff]
        %v1301 = vld [vmem:[%s276 + $0x40] sm:$0xff]
        %v1302 = vld [vmem:[%s276 + $0x48] sm:$0xff]
        %v1303 = vld [vmem:[%s276 + $0x50] sm:$0xff]
        %v1304 = vld [vmem:[%s276 + $0x58] sm:$0xff]
        %v1305 = vld [vmem:[%s276 + $0x60] sm:$0xff]
        %v1306 = vld [vmem:[%s276 + $0x68] sm:$0xff]
        %v1307 = vld [vmem:[%s276 + $0x70] sm:$0xff]
        %v1308 = vld [vmem:[%s276 + $0x78] sm:$0xff]
        %v1309 = vld [vmem:[%s5] sm:$0xf]
        %s1310 = scalar_lea.vmem %s5, 4
        %v1311 = vld [vmem:[%s1310] sm:$0xf]
        %v1313 = vsel %vm361, %v1311, 0
        %1315 = vmatpush.msra.mxu0 0.0
        %1316 = vmatpush.msra.mxu0 0.0
        %1317 = vmatpush.msra.mxu0 0.0
        %1318 = vmatpush.msra.mxu0 0.0
        %1319 = vmatpush.msra.mxu0 0.0
        %1320 = vmatpush.msra.mxu0 0.0
        %1321 = vmatpush.msra.mxu0 0.0
        %1322 = vmatpush.msra.mxu0 0.0
        %1323 = vmatpush.msra.mxu0 0.0
        %1324 = vmatpush.msra.mxu0 0.0
        %1325 = vmatpush.msra.mxu0 0.0
        %1326 = vmatpush.msra.mxu0 0.0
        %1327 = vmatpush.msra.mxu0 0.0
        %1328 = vmatpush.msra.mxu0 0.0
        %1329 = vmatpush.msra.mxu0 0.0
        %1330 = vmatpush.msra.mxu0 %v1313
        %1331 = vmatmul.f32.gmra.mxu0 %v820
        %v1332 = vpop.f32.mrf.mxu0
        %v1333 = vadd.f32 0.0, %v1332
        %1334 = vmatmul.f32.gmra.mxu0 %v823
        %v1335 = vpop.f32.mrf.mxu0
        %v1336 = vadd.f32 0.0, %v1335
        %1337 = vmatmul.f32.gmra.mxu0 %v826
        %v1338 = vpop.f32.mrf.mxu0
        %v1339 = vadd.f32 0.0, %v1338
        %1340 = vmatmul.f32.gmra.mxu0 %v829
        %v1341 = vpop.f32.mrf.mxu0
        %v1342 = vadd.f32 0.0, %v1341
        %1343 = vmatmul.f32.gmra.mxu0 %v832
        %v1344 = vpop.f32.mrf.mxu0
        %v1345 = vadd.f32 0.0, %v1344
        %1346 = vmatmul.f32.gmra.mxu0 %v835
        %v1347 = vpop.f32.mrf.mxu0
        %v1348 = vadd.f32 0.0, %v1347
        %1349 = vmatmul.f32.gmra.mxu0 %v838
        %v1350 = vpop.f32.mrf.mxu0
        %v1351 = vadd.f32 0.0, %v1350
        %1352 = vmatmul.f32.gmra.mxu0 %v841
        %v1353 = vpop.f32.mrf.mxu0
        %v1354 = vadd.f32 0.0, %v1353
        %1355 = vmatmul.f32.gmra.mxu0 %v844
        %v1356 = vpop.f32.mrf.mxu0
        %v1357 = vadd.f32 0.0, %v1356
        %1358 = vmatmul.f32.gmra.mxu0 %v847
        %v1359 = vpop.f32.mrf.mxu0
        %v1360 = vadd.f32 0.0, %v1359
        %1361 = vmatmul.f32.gmra.mxu0 %v850
        %v1362 = vpop.f32.mrf.mxu0
        %v1363 = vadd.f32 0.0, %v1362
        %1364 = vmatmul.f32.gmra.mxu0 %v853
        %v1365 = vpop.f32.mrf.mxu0
        %v1366 = vadd.f32 0.0, %v1365
        %1367 = vmatmul.f32.gmra.mxu0 %v856
        %v1368 = vpop.f32.mrf.mxu0
        %v1369 = vadd.f32 0.0, %v1368
        %1370 = vmatmul.f32.gmra.mxu0 %v859
        %v1371 = vpop.f32.mrf.mxu0
        %v1372 = vadd.f32 0.0, %v1371
        %1373 = vmatmul.f32.gmra.mxu0 %v862
        %v1374 = vpop.f32.mrf.mxu0
        %v1375 = vadd.f32 0.0, %v1374
        %1376 = vmatmul.f32.gmra.mxu0 %v865
        %v1377 = vpop.f32.mrf.mxu0
        %v1378 = vadd.f32 0.0, %v1377
        %1379 = vdwg.mxu0
        %v1381 = vsel %vm312, %v1293, 0
        %v1384 = vsel %vm312, %v1294, 0
        %v1387 = vsel %vm312, %v1295, 0
        %v1390 = vsel %vm312, %v1296, 0
        %v1393 = vsel %vm312, %v1297, 0
        %v1396 = vsel %vm312, %v1298, 0
        %v1399 = vsel %vm312, %v1299, 0
        %v1402 = vsel %vm312, %v1300, 0
        %v1405 = vsel %vm312, %v1301, 0
        %v1408 = vsel %vm312, %v1302, 0
        %v1411 = vsel %vm312, %v1303, 0
        %v1414 = vsel %vm312, %v1304, 0
        %v1417 = vsel %vm312, %v1305, 0
        %v1420 = vsel %vm312, %v1306, 0
        %v1423 = vsel %vm312, %v1307, 0
        %v1426 = vsel %vm312, %v1308, 0
        %v1429 = vsel %vm361, %v1309, 0
        %1431 = vmatpush.msra.mxu0 0.0
        %1432 = vmatpush.msra.mxu0 0.0
        %1433 = vmatpush.msra.mxu0 0.0
        %1434 = vmatpush.msra.mxu0 0.0
        %1435 = vmatpush.msra.mxu0 0.0
        %1436 = vmatpush.msra.mxu0 0.0
        %1437 = vmatpush.msra.mxu0 0.0
        %1438 = vmatpush.msra.mxu0 0.0
        %1439 = vmatpush.msra.mxu0 0.0
        %1440 = vmatpush.msra.mxu0 0.0
        %1441 = vmatpush.msra.mxu0 0.0
        %1442 = vmatpush.msra.mxu0 0.0
        %1443 = vmatpush.msra.mxu0 0.0
        %1444 = vmatpush.msra.mxu0 0.0
        %1445 = vmatpush.msra.mxu0 0.0
        %1446 = vmatpush.msra.mxu0 %v1429
        %1447 = vmatmul.f32.gmra.mxu0 %v1381
        %v1448 = vpop.f32.mrf.mxu0
        %v1449 = vadd.f32 %v1333, %v1448
        %1450 = vmatmul.f32.gmra.mxu0 %v1384
        %v1451 = vpop.f32.mrf.mxu0
        %v1452 = vadd.f32 %v1336, %v1451
        %1453 = vmatmul.f32.gmra.mxu0 %v1387
        %v1454 = vpop.f32.mrf.mxu0
        %v1455 = vadd.f32 %v1339, %v1454
        %1456 = vmatmul.f32.gmra.mxu0 %v1390
        %v1457 = vpop.f32.mrf.mxu0
        %v1458 = vadd.f32 %v1342, %v1457
        %1459 = vmatmul.f32.gmra.mxu0 %v1393
        %v1460 = vpop.f32.mrf.mxu0
        %v1461 = vadd.f32 %v1345, %v1460
        %1462 = vmatmul.f32.gmra.mxu0 %v1396
        %v1463 = vpop.f32.mrf.mxu0
        %v1464 = vadd.f32 %v1348, %v1463
        %1465 = vmatmul.f32.gmra.mxu0 %v1399
        %v1466 = vpop.f32.mrf.mxu0
        %v1467 = vadd.f32 %v1351, %v1466
        %1468 = vmatmul.f32.gmra.mxu0 %v1402
        %v1469 = vpop.f32.mrf.mxu0
        %v1470 = vadd.f32 %v1354, %v1469
        %1471 = vmatmul.f32.gmra.mxu0 %v1405
        %v1472 = vpop.f32.mrf.mxu0
        %v1473 = vadd.f32 %v1357, %v1472
        %1474 = vmatmul.f32.gmra.mxu0 %v1408
        %v1475 = vpop.f32.mrf.mxu0
        %v1476 = vadd.f32 %v1360, %v1475
        %1477 = vmatmul.f32.gmra.mxu0 %v1411
        %v1478 = vpop.f32.mrf.mxu0
        %v1479 = vadd.f32 %v1363, %v1478
        %1480 = vmatmul.f32.gmra.mxu0 %v1414
        %v1481 = vpop.f32.mrf.mxu0
        %v1482 = vadd.f32 %v1366, %v1481
        %1483 = vmatmul.f32.gmra.mxu0 %v1417
        %v1484 = vpop.f32.mrf.mxu0
        %v1485 = vadd.f32 %v1369, %v1484
        %1486 = vmatmul.f32.gmra.mxu0 %v1420
        %v1487 = vpop.f32.mrf.mxu0
        %v1488 = vadd.f32 %v1372, %v1487
        %1489 = vmatmul.f32.gmra.mxu0 %v1423
        %v1490 = vpop.f32.mrf.mxu0
        %v1491 = vadd.f32 %v1375, %v1490
        %1492 = vmatmul.f32.gmra.mxu0 %v1426
        %v1493 = vpop.f32.mrf.mxu0
        %v1494 = vadd.f32 %v1378, %v1493
        %1495 = vdwg.mxu0
        %s1496 = scalar_lea.vmem %s5, 8
        %v1497 = vld [vmem:[%s1496] sm:$0xf]
        %v1499 = vsel %vm361, %v1497, 0
        %1501 = vmatpush.msra.mxu0 0.0
        %1502 = vmatpush.msra.mxu0 0.0
        %1503 = vmatpush.msra.mxu0 0.0
        %1504 = vmatpush.msra.mxu0 0.0
        %1505 = vmatpush.msra.mxu0 0.0
        %1506 = vmatpush.msra.mxu0 0.0
        %1507 = vmatpush.msra.mxu0 0.0
        %1508 = vmatpush.msra.mxu0 0.0
        %1509 = vmatpush.msra.mxu0 0.0
        %1510 = vmatpush.msra.mxu0 0.0
        %1511 = vmatpush.msra.mxu0 0.0
        %1512 = vmatpush.msra.mxu0 0.0
        %1513 = vmatpush.msra.mxu0 0.0
        %1514 = vmatpush.msra.mxu0 0.0
        %1515 = vmatpush.msra.mxu0 0.0
        %1516 = vmatpush.msra.mxu0 %v1499
        %1517 = vmatmul.f32.gmra.mxu0 %v431
        %v1518 = vpop.f32.mrf.mxu0
        %v1519 = vadd.f32 0.0, %v1518
        %1520 = vmatmul.f32.gmra.mxu0 %v434
        %v1521 = vpop.f32.mrf.mxu0
        %v1522 = vadd.f32 0.0, %v1521
        %1523 = vmatmul.f32.gmra.mxu0 %v437
        %v1524 = vpop.f32.mrf.mxu0
        %v1525 = vadd.f32 0.0, %v1524
        %1526 = vmatmul.f32.gmra.mxu0 %v440
        %v1527 = vpop.f32.mrf.mxu0
        %v1528 = vadd.f32 0.0, %v1527
        %1529 = vmatmul.f32.gmra.mxu0 %v443
        %v1530 = vpop.f32.mrf.mxu0
        %v1531 = vadd.f32 0.0, %v1530
        %1532 = vmatmul.f32.gmra.mxu0 %v446
        %v1533 = vpop.f32.mrf.mxu0
        %v1534 = vadd.f32 0.0, %v1533
        %1535 = vmatmul.f32.gmra.mxu0 %v449
        %v1536 = vpop.f32.mrf.mxu0
        %v1537 = vadd.f32 0.0, %v1536
        %1538 = vmatmul.f32.gmra.mxu0 %v452
        %v1539 = vpop.f32.mrf.mxu0
        %v1540 = vadd.f32 0.0, %v1539
        %1541 = vmatmul.f32.gmra.mxu0 %v455
        %v1542 = vpop.f32.mrf.mxu0
        %v1543 = vadd.f32 0.0, %v1542
        %1544 = vmatmul.f32.gmra.mxu0 %v458
        %v1545 = vpop.f32.mrf.mxu0
        %v1546 = vadd.f32 0.0, %v1545
        %1547 = vmatmul.f32.gmra.mxu0 %v461
        %v1548 = vpop.f32.mrf.mxu0
        %v1549 = vadd.f32 0.0, %v1548
        %1550 = vmatmul.f32.gmra.mxu0 %v464
        %v1551 = vpop.f32.mrf.mxu0
        %v1552 = vadd.f32 0.0, %v1551
        %1553 = vmatmul.f32.gmra.mxu0 %v467
        %v1554 = vpop.f32.mrf.mxu0
        %v1555 = vadd.f32 0.0, %v1554
        %1556 = vmatmul.f32.gmra.mxu0 %v470
        %v1557 = vpop.f32.mrf.mxu0
        %v1558 = vadd.f32 0.0, %v1557
        %1559 = vmatmul.f32.gmra.mxu0 %v473
        %v1560 = vpop.f32.mrf.mxu0
        %v1561 = vadd.f32 0.0, %v1560
        %1562 = vmatmul.f32.gmra.mxu0 %v476
        %v1563 = vpop.f32.mrf.mxu0
        %v1564 = vadd.f32 0.0, %v1563
        %1565 = vdwg.mxu0
        %v1566 = vadd.f32 %v1449, %v1519
        %v1567 = vadd.f32 %v1452, %v1522
        %v1568 = vadd.f32 %v1455, %v1525
        %v1569 = vadd.f32 %v1458, %v1528
        %v1570 = vadd.f32 %v1461, %v1531
        %v1571 = vadd.f32 %v1464, %v1534
        %v1572 = vadd.f32 %v1467, %v1537
        %v1573 = vadd.f32 %v1470, %v1540
        %v1574 = vadd.f32 %v1473, %v1543
        %v1575 = vadd.f32 %v1476, %v1546
        %v1576 = vadd.f32 %v1479, %v1549
        %v1577 = vadd.f32 %v1482, %v1552
        %v1578 = vadd.f32 %v1485, %v1555
        %v1579 = vadd.f32 %v1488, %v1558
        %v1580 = vadd.f32 %v1491, %v1561
        %v1581 = vadd.f32 %v1494, %v1564
        %s1582 = scalar_lea.vmem %s5, 12
        %v1583 = vld [vmem:[%s1582] sm:$0xf]
        %v1585 = vsel %vm361, %v1583, 0
        %1587 = vmatpush.msra.mxu0 0.0
        %1588 = vmatpush.msra.mxu0 0.0
        %1589 = vmatpush.msra.mxu0 0.0
        %1590 = vmatpush.msra.mxu0 0.0
        %1591 = vmatpush.msra.mxu0 0.0
        %1592 = vmatpush.msra.mxu0 0.0
        %1593 = vmatpush.msra.mxu0 0.0
        %1594 = vmatpush.msra.mxu0 0.0
        %1595 = vmatpush.msra.mxu0 0.0
        %1596 = vmatpush.msra.mxu0 0.0
        %1597 = vmatpush.msra.mxu0 0.0
        %1598 = vmatpush.msra.mxu0 0.0
        %1599 = vmatpush.msra.mxu0 0.0
        %1600 = vmatpush.msra.mxu0 0.0
        %1601 = vmatpush.msra.mxu0 0.0
        %1602 = vmatpush.msra.mxu0 %v1585
        %1603 = vmatmul.f32.gmra.mxu0 %v314
        %v1604 = vpop.f32.mrf.mxu0
        %v1605 = vadd.f32 0.0, %v1604
        %1606 = vmatmul.f32.gmra.mxu0 %v317
        %v1607 = vpop.f32.mrf.mxu0
        %v1608 = vadd.f32 0.0, %v1607
        %1609 = vmatmul.f32.gmra.mxu0 %v320
        %v1610 = vpop.f32.mrf.mxu0
        %v1611 = vadd.f32 0.0, %v1610
        %1612 = vmatmul.f32.gmra.mxu0 %v323
        %v1613 = vpop.f32.mrf.mxu0
        %v1614 = vadd.f32 0.0, %v1613
        %1615 = vmatmul.f32.gmra.mxu0 %v326
        %v1616 = vpop.f32.mrf.mxu0
        %v1617 = vadd.f32 0.0, %v1616
        %1618 = vmatmul.f32.gmra.mxu0 %v329
        %v1619 = vpop.f32.mrf.mxu0
        %v1620 = vadd.f32 0.0, %v1619
        %1621 = vmatmul.f32.gmra.mxu0 %v332
        %v1622 = vpop.f32.mrf.mxu0
        %v1623 = vadd.f32 0.0, %v1622
        %1624 = vmatmul.f32.gmra.mxu0 %v335
        %v1625 = vpop.f32.mrf.mxu0
        %v1626 = vadd.f32 0.0, %v1625
        %1627 = vmatmul.f32.gmra.mxu0 %v338
        %v1628 = vpop.f32.mrf.mxu0
        %v1629 = vadd.f32 0.0, %v1628
        %1630 = vmatmul.f32.gmra.mxu0 %v341
        %v1631 = vpop.f32.mrf.mxu0
        %v1632 = vadd.f32 0.0, %v1631
        %1633 = vmatmul.f32.gmra.mxu0 %v344
        %v1634 = vpop.f32.mrf.mxu0
        %v1635 = vadd.f32 0.0, %v1634
        %1636 = vmatmul.f32.gmra.mxu0 %v347
        %v1637 = vpop.f32.mrf.mxu0
        %v1638 = vadd.f32 0.0, %v1637
        %1639 = vmatmul.f32.gmra.mxu0 %v350
        %v1640 = vpop.f32.mrf.mxu0
        %v1641 = vadd.f32 0.0, %v1640
        %1642 = vmatmul.f32.gmra.mxu0 %v353
        %v1643 = vpop.f32.mrf.mxu0
        %v1644 = vadd.f32 0.0, %v1643
        %1645 = vmatmul.f32.gmra.mxu0 %v356
        %v1646 = vpop.f32.mrf.mxu0
        %v1647 = vadd.f32 0.0, %v1646
        %1648 = vmatmul.f32.gmra.mxu0 %v359
        %v1649 = vpop.f32.mrf.mxu0
        %v1650 = vadd.f32 0.0, %v1649
        %1651 = vdwg.mxu0
        %v1652 = vadd.f32 %v1566, %v1605
        %v1653 = vadd.f32 %v1567, %v1608
        %v1654 = vadd.f32 %v1568, %v1611
        %v1655 = vadd.f32 %v1569, %v1614
        %v1656 = vadd.f32 %v1570, %v1617
        %v1657 = vadd.f32 %v1571, %v1620
        %v1658 = vadd.f32 %v1572, %v1623
        %v1659 = vadd.f32 %v1573, %v1626
        %v1660 = vadd.f32 %v1574, %v1629
        %v1661 = vadd.f32 %v1575, %v1632
        %v1662 = vadd.f32 %v1576, %v1635
        %v1663 = vadd.f32 %v1577, %v1638
        %v1664 = vadd.f32 %v1578, %v1641
        %v1665 = vadd.f32 %v1579, %v1644
        %v1666 = vadd.f32 %v1580, %v1647
        %v1667 = vadd.f32 %v1581, %v1650
        %s1668 = scalar_lea.vmem %s5, 16
        %v1669 = vld [vmem:[%s1668] sm:$0xf]
        %v1671 = vsel %vm361, %v1669, 0
        %1673 = vmatpush.msra.mxu0 0.0
        %1674 = vmatpush.msra.mxu0 0.0
        %1675 = vmatpush.msra.mxu0 0.0
        %1676 = vmatpush.msra.mxu0 0.0
        %1677 = vmatpush.msra.mxu0 0.0
        %1678 = vmatpush.msra.mxu0 0.0
        %1679 = vmatpush.msra.mxu0 0.0
        %1680 = vmatpush.msra.mxu0 0.0
        %1681 = vmatpush.msra.mxu0 0.0
        %1682 = vmatpush.msra.mxu0 0.0
        %1683 = vmatpush.msra.mxu0 0.0
        %1684 = vmatpush.msra.mxu0 0.0
        %1685 = vmatpush.msra.mxu0 0.0
        %1686 = vmatpush.msra.mxu0 0.0
        %1687 = vmatpush.msra.mxu0 0.0
        %1688 = vmatpush.msra.mxu0 %v1671
        %1689 = vmatmul.f32.gmra.mxu0 %v565
        %v1690 = vpop.f32.mrf.mxu0
        %v1691 = vadd.f32 0.0, %v1690
        %1692 = vmatmul.f32.gmra.mxu0 %v568
        %v1693 = vpop.f32.mrf.mxu0
        %v1694 = vadd.f32 0.0, %v1693
        %1695 = vmatmul.f32.gmra.mxu0 %v571
        %v1696 = vpop.f32.mrf.mxu0
        %v1697 = vadd.f32 0.0, %v1696
        %1698 = vmatmul.f32.gmra.mxu0 %v574
        %v1699 = vpop.f32.mrf.mxu0
        %v1700 = vadd.f32 0.0, %v1699
        %1701 = vmatmul.f32.gmra.mxu0 %v577
        %v1702 = vpop.f32.mrf.mxu0
        %v1703 = vadd.f32 0.0, %v1702
        %1704 = vmatmul.f32.gmra.mxu0 %v580
        %v1705 = vpop.f32.mrf.mxu0
        %v1706 = vadd.f32 0.0, %v1705
        %1707 = vmatmul.f32.gmra.mxu0 %v583
        %v1708 = vpop.f32.mrf.mxu0
        %v1709 = vadd.f32 0.0, %v1708
        %1710 = vmatmul.f32.gmra.mxu0 %v586
        %v1711 = vpop.f32.mrf.mxu0
        %v1712 = vadd.f32 0.0, %v1711
        %1713 = vmatmul.f32.gmra.mxu0 %v589
        %v1714 = vpop.f32.mrf.mxu0
        %v1715 = vadd.f32 0.0, %v1714
        %1716 = vmatmul.f32.gmra.mxu0 %v592
        %v1717 = vpop.f32.mrf.mxu0
        %v1718 = vadd.f32 0.0, %v1717
        %1719 = vmatmul.f32.gmra.mxu0 %v595
        %v1720 = vpop.f32.mrf.mxu0
        %v1721 = vadd.f32 0.0, %v1720
        %1722 = vmatmul.f32.gmra.mxu0 %v598
        %v1723 = vpop.f32.mrf.mxu0
        %v1724 = vadd.f32 0.0, %v1723
        %1725 = vmatmul.f32.gmra.mxu0 %v601
        %v1726 = vpop.f32.mrf.mxu0
        %v1727 = vadd.f32 0.0, %v1726
        %1728 = vmatmul.f32.gmra.mxu0 %v604
        %v1729 = vpop.f32.mrf.mxu0
        %v1730 = vadd.f32 0.0, %v1729
        %1731 = vmatmul.f32.gmra.mxu0 %v607
        %v1732 = vpop.f32.mrf.mxu0
        %v1733 = vadd.f32 0.0, %v1732
        %1734 = vmatmul.f32.gmra.mxu0 %v610
        %v1735 = vpop.f32.mrf.mxu0
        %v1736 = vadd.f32 0.0, %v1735
        %1737 = vdwg.mxu0
        %v1738 = vadd.f32 %v1652, %v1691
        %v1739 = vadd.f32 %v1653, %v1694
        %v1740 = vadd.f32 %v1654, %v1697
        %v1741 = vadd.f32 %v1655, %v1700
        %v1742 = vadd.f32 %v1656, %v1703
        %v1743 = vadd.f32 %v1657, %v1706
        %v1744 = vadd.f32 %v1658, %v1709
        %v1745 = vadd.f32 %v1659, %v1712
        %v1746 = vadd.f32 %v1660, %v1715
        %v1747 = vadd.f32 %v1661, %v1718
        %v1748 = vadd.f32 %v1662, %v1721
        %v1749 = vadd.f32 %v1663, %v1724
        %v1750 = vadd.f32 %v1664, %v1727
        %v1751 = vadd.f32 %v1665, %v1730
        %v1752 = vadd.f32 %v1666, %v1733
        %v1753 = vadd.f32 %v1667, %v1736
        %s1754 = scalar_lea.vmem %s5, 20
        %v1755 = vld [vmem:[%s1754] sm:$0xf]
        %v1757 = vsel %vm361, %v1755, 0
        %1759 = vmatpush.msra.mxu0 0.0
        %1760 = vmatpush.msra.mxu0 0.0
        %1761 = vmatpush.msra.mxu0 0.0
        %1762 = vmatpush.msra.mxu0 0.0
        %1763 = vmatpush.msra.mxu0 0.0
        %1764 = vmatpush.msra.mxu0 0.0
        %1765 = vmatpush.msra.mxu0 0.0
        %1766 = vmatpush.msra.mxu0 0.0
        %1767 = vmatpush.msra.mxu0 0.0
        %1768 = vmatpush.msra.mxu0 0.0
        %1769 = vmatpush.msra.mxu0 0.0
        %1770 = vmatpush.msra.mxu0 0.0
        %1771 = vmatpush.msra.mxu0 0.0
        %1772 = vmatpush.msra.mxu0 0.0
        %1773 = vmatpush.msra.mxu0 0.0
        %1774 = vmatpush.msra.mxu0 %v1757
        %1775 = vmatmul.f32.gmra.mxu0 %v1126
        %v1776 = vpop.f32.mrf.mxu0
        %v1777 = vadd.f32 0.0, %v1776
        %1778 = vmatmul.f32.gmra.mxu0 %v1129
        %v1779 = vpop.f32.mrf.mxu0
        %v1780 = vadd.f32 0.0, %v1779
        %1781 = vmatmul.f32.gmra.mxu0 %v1132
        %v1782 = vpop.f32.mrf.mxu0
        %v1783 = vadd.f32 0.0, %v1782
        %1784 = vmatmul.f32.gmra.mxu0 %v1135
        %v1785 = vpop.f32.mrf.mxu0
        %v1786 = vadd.f32 0.0, %v1785
        %1787 = vmatmul.f32.gmra.mxu0 %v1138
        %v1788 = vpop.f32.mrf.mxu0
        %v1789 = vadd.f32 0.0, %v1788
        %1790 = vmatmul.f32.gmra.mxu0 %v1141
        %v1791 = vpop.f32.mrf.mxu0
        %v1792 = vadd.f32 0.0, %v1791
        %1793 = vmatmul.f32.gmra.mxu0 %v1144
        %v1794 = vpop.f32.mrf.mxu0
        %v1795 = vadd.f32 0.0, %v1794
        %1796 = vmatmul.f32.gmra.mxu0 %v1147
        %v1797 = vpop.f32.mrf.mxu0
        %v1798 = vadd.f32 0.0, %v1797
        %1799 = vmatmul.f32.gmra.mxu0 %v1150
        %v1800 = vpop.f32.mrf.mxu0
        %v1801 = vadd.f32 0.0, %v1800
        %1802 = vmatmul.f32.gmra.mxu0 %v1153
        %v1803 = vpop.f32.mrf.mxu0
        %v1804 = vadd.f32 0.0, %v1803
        %1805 = vmatmul.f32.gmra.mxu0 %v1156
        %v1806 = vpop.f32.mrf.mxu0
        %v1807 = vadd.f32 0.0, %v1806
        %1808 = vmatmul.f32.gmra.mxu0 %v1159
        %v1809 = vpop.f32.mrf.mxu0
        %v1810 = vadd.f32 0.0, %v1809
        %1811 = vmatmul.f32.gmra.mxu0 %v1162
        %v1812 = vpop.f32.mrf.mxu0
        %v1813 = vadd.f32 0.0, %v1812
        %1814 = vmatmul.f32.gmra.mxu0 %v1165
        %v1815 = vpop.f32.mrf.mxu0
        %v1816 = vadd.f32 0.0, %v1815
        %1817 = vmatmul.f32.gmra.mxu0 %v1168
        %v1818 = vpop.f32.mrf.mxu0
        %v1819 = vadd.f32 0.0, %v1818
        %1820 = vmatmul.f32.gmra.mxu0 %v1171
        %v1821 = vpop.f32.mrf.mxu0
        %v1822 = vadd.f32 0.0, %v1821
        %1823 = vdwg.mxu0
        %v1824 = vadd.f32 %v1738, %v1777
        %v1825 = vadd.f32 %v1739, %v1780
        %v1826 = vadd.f32 %v1740, %v1783
        %v1827 = vadd.f32 %v1741, %v1786
        %v1828 = vadd.f32 %v1742, %v1789
        %v1829 = vadd.f32 %v1743, %v1792
        %v1830 = vadd.f32 %v1744, %v1795
        %v1831 = vadd.f32 %v1745, %v1798
        %v1832 = vadd.f32 %v1746, %v1801
        %v1833 = vadd.f32 %v1747, %v1804
        %v1834 = vadd.f32 %v1748, %v1807
        %v1835 = vadd.f32 %v1749, %v1810
        %v1836 = vadd.f32 %v1750, %v1813
        %v1837 = vadd.f32 %v1751, %v1816
        %v1838 = vadd.f32 %v1752, %v1819
        %v1839 = vadd.f32 %v1753, %v1822
        %v1840 = vld [vmem:[%s276 + $0x6] sm:$0xff]
        %v1841 = vld [vmem:[%s276 + $0xe] sm:$0xff]
        %v1842 = vld [vmem:[%s276 + $0x16] sm:$0xff]
        %v1843 = vld [vmem:[%s276 + $0x1e] sm:$0xff]
        %v1844 = vld [vmem:[%s276 + $0x26] sm:$0xff]
        %v1845 = vld [vmem:[%s276 + $0x2e] sm:$0xff]
        %v1846 = vld [vmem:[%s276 + $0x36] sm:$0xff]
        %v1847 = vld [vmem:[%s276 + $0x3e] sm:$0xff]
        %v1848 = vld [vmem:[%s276 + $0x46] sm:$0xff]
        %v1849 = vld [vmem:[%s276 + $0x4e] sm:$0xff]
        %v1850 = vld [vmem:[%s276 + $0x56] sm:$0xff]
        %v1851 = vld [vmem:[%s276 + $0x5e] sm:$0xff]
        %v1852 = vld [vmem:[%s276 + $0x66] sm:$0xff]
        %v1853 = vld [vmem:[%s276 + $0x6e] sm:$0xff]
        %v1854 = vld [vmem:[%s276 + $0x76] sm:$0xff]
        %v1855 = vld [vmem:[%s276 + $0x7e] sm:$0xff]
        %s1856 = scalar_lea.vmem %s5, 24
        %v1857 = vld [vmem:[%s1856] sm:$0xf]
        %v1859 = vsel %vm312, %v1840, 0
        %v1862 = vsel %vm312, %v1841, 0
        %v1865 = vsel %vm312, %v1842, 0
        %v1868 = vsel %vm312, %v1843, 0
        %v1871 = vsel %vm312, %v1844, 0
        %v1874 = vsel %vm312, %v1845, 0
        %v1877 = vsel %vm312, %v1846, 0
        %v1880 = vsel %vm312, %v1847, 0
        %v1883 = vsel %vm312, %v1848, 0
        %v1886 = vsel %vm312, %v1849, 0
        %v1889 = vsel %vm312, %v1850, 0
        %v1892 = vsel %vm312, %v1851, 0
        %v1895 = vsel %vm312, %v1852, 0
        %v1898 = vsel %vm312, %v1853, 0
        %v1901 = vsel %vm312, %v1854, 0
        %v1904 = vsel %vm312, %v1855, 0
        %v1907 = vsel %vm361, %v1857, 0
        %1909 = vmatpush.msra.mxu0 0.0
        %1910 = vmatpush.msra.mxu0 0.0
        %1911 = vmatpush.msra.mxu0 0.0
        %1912 = vmatpush.msra.mxu0 0.0
        %1913 = vmatpush.msra.mxu0 0.0
        %1914 = vmatpush.msra.mxu0 0.0
        %1915 = vmatpush.msra.mxu0 0.0
        %1916 = vmatpush.msra.mxu0 0.0
        %1917 = vmatpush.msra.mxu0 0.0
        %1918 = vmatpush.msra.mxu0 0.0
        %1919 = vmatpush.msra.mxu0 0.0
        %1920 = vmatpush.msra.mxu0 0.0
        %1921 = vmatpush.msra.mxu0 0.0
        %1922 = vmatpush.msra.mxu0 0.0
        %1923 = vmatpush.msra.mxu0 0.0
        %1924 = vmatpush.msra.mxu0 %v1907
        %1925 = vmatmul.f32.gmra.mxu0 %v1859
        %v1926 = vpop.f32.mrf.mxu0
        %v1927 = vadd.f32 0.0, %v1926
        %1928 = vmatmul.f32.gmra.mxu0 %v1862
        %v1929 = vpop.f32.mrf.mxu0
        %v1930 = vadd.f32 0.0, %v1929
        %1931 = vmatmul.f32.gmra.mxu0 %v1865
        %v1932 = vpop.f32.mrf.mxu0
        %v1933 = vadd.f32 0.0, %v1932
        %1934 = vmatmul.f32.gmra.mxu0 %v1868
        %v1935 = vpop.f32.mrf.mxu0
        %v1936 = vadd.f32 0.0, %v1935
        %1937 = vmatmul.f32.gmra.mxu0 %v1871
        %v1938 = vpop.f32.mrf.mxu0
        %v1939 = vadd.f32 0.0, %v1938
        %1940 = vmatmul.f32.gmra.mxu0 %v1874
        %v1941 = vpop.f32.mrf.mxu0
        %v1942 = vadd.f32 0.0, %v1941
        %1943 = vmatmul.f32.gmra.mxu0 %v1877
        %v1944 = vpop.f32.mrf.mxu0
        %v1945 = vadd.f32 0.0, %v1944
        %1946 = vmatmul.f32.gmra.mxu0 %v1880
        %v1947 = vpop.f32.mrf.mxu0
        %v1948 = vadd.f32 0.0, %v1947
        %1949 = vmatmul.f32.gmra.mxu0 %v1883
        %v1950 = vpop.f32.mrf.mxu0
        %v1951 = vadd.f32 0.0, %v1950
        %1952 = vmatmul.f32.gmra.mxu0 %v1886
        %v1953 = vpop.f32.mrf.mxu0
        %v1954 = vadd.f32 0.0, %v1953
        %1955 = vmatmul.f32.gmra.mxu0 %v1889
        %v1956 = vpop.f32.mrf.mxu0
        %v1957 = vadd.f32 0.0, %v1956
        %1958 = vmatmul.f32.gmra.mxu0 %v1892
        %v1959 = vpop.f32.mrf.mxu0
        %v1960 = vadd.f32 0.0, %v1959
        %1961 = vmatmul.f32.gmra.mxu0 %v1895
        %v1962 = vpop.f32.mrf.mxu0
        %v1963 = vadd.f32 0.0, %v1962
        %1964 = vmatmul.f32.gmra.mxu0 %v1898
        %v1965 = vpop.f32.mrf.mxu0
        %v1966 = vadd.f32 0.0, %v1965
        %1967 = vmatmul.f32.gmra.mxu0 %v1901
        %v1968 = vpop.f32.mrf.mxu0
        %v1969 = vadd.f32 0.0, %v1968
        %1970 = vmatmul.f32.gmra.mxu0 %v1904
        %v1971 = vpop.f32.mrf.mxu0
        %v1972 = vadd.f32 0.0, %v1971
        %1973 = vdwg.mxu0
        %v1974 = vadd.f32 %v1824, %v1927
        %v1975 = vadd.f32 %v1825, %v1930
        %v1976 = vadd.f32 %v1826, %v1933
        %v1977 = vadd.f32 %v1827, %v1936
        %v1978 = vadd.f32 %v1828, %v1939
        %v1979 = vadd.f32 %v1829, %v1942
        %v1980 = vadd.f32 %v1830, %v1945
        %v1981 = vadd.f32 %v1831, %v1948
        %v1982 = vadd.f32 %v1832, %v1951
        %v1983 = vadd.f32 %v1833, %v1954
        %v1984 = vadd.f32 %v1834, %v1957
        %v1985 = vadd.f32 %v1835, %v1960
        %v1986 = vadd.f32 %v1836, %v1963
        %v1987 = vadd.f32 %v1837, %v1966
        %v1988 = vadd.f32 %v1838, %v1969
        %v1989 = vadd.f32 %v1839, %v1972
        %v1990 = vld [vmem:[%s6] sm:$0x1]
        %v1992 = vperm.slane %v1990, 0
        %v1994 = vadd.f32 %v1974, %v1992
        %v1995 = vadd.f32 %v1975, %v1992
        %v1996 = vadd.f32 %v1976, %v1992
        %v1997 = vadd.f32 %v1977, %v1992
        %v1998 = vadd.f32 %v1978, %v1992
        %v1999 = vadd.f32 %v1979, %v1992
        %v2000 = vadd.f32 %v1980, %v1992
        %v2001 = vadd.f32 %v1981, %v1992
        %v2002 = vadd.f32 %v1982, %v1992
        %v2003 = vadd.f32 %v1983, %v1992
        %v2004 = vadd.f32 %v1984, %v1992
        %v2005 = vadd.f32 %v1985, %v1992
        %v2006 = vadd.f32 %v1986, %v1992
        %v2007 = vadd.f32 %v1987, %v1992
        %v2008 = vadd.f32 %v1988, %v1992
        %v2009 = vadd.f32 %v1989, %v1992
        %v2010 = vmax.f32 %v1994, 0.0
        %v2011 = vmax.f32 %v1995, 0.0
        %v2012 = vmax.f32 %v1996, 0.0
        %v2013 = vmax.f32 %v1997, 0.0
        %v2014 = vmax.f32 %v1998, 0.0
        %v2015 = vmax.f32 %v1999, 0.0
        %v2016 = vmax.f32 %v2000, 0.0
        %v2017 = vmax.f32 %v2001, 0.0
        %v2018 = vmax.f32 %v2002, 0.0
        %v2019 = vmax.f32 %v2003, 0.0
        %v2020 = vmax.f32 %v2004, 0.0
        %v2021 = vmax.f32 %v2005, 0.0
        %v2022 = vmax.f32 %v2006, 0.0
        %v2023 = vmax.f32 %v2007, 0.0
        %v2024 = vmax.f32 %v2008, 0.0
        %v2025 = vmax.f32 %v2009, 0.0
        %2042 = vrot.lane.b32.xlu0 %v1277, 32
        %v2043 = vpop.permute.xlu0 %2042
        %2044 = vrot.lane.b32.xlu0 %v1278, 32
        %v2045 = vpop.permute.xlu0 %2044
        %2046 = vrot.lane.b32.xlu0 %v1279, 32
        %v2047 = vpop.permute.xlu0 %2046
        %2048 = vrot.lane.b32.xlu0 %v1280, 32
        %v2049 = vpop.permute.xlu0 %2048
        %2050 = vrot.lane.b32.xlu0 %v1281, 32
        %v2051 = vpop.permute.xlu0 %2050
        %2052 = vrot.lane.b32.xlu0 %v1282, 32
        %v2053 = vpop.permute.xlu0 %2052
        %2054 = vrot.lane.b32.xlu0 %v1283, 32
        %v2055 = vpop.permute.xlu0 %2054
        %2056 = vrot.lane.b32.xlu0 %v1284, 32
        %v2057 = vpop.permute.xlu0 %2056
        %2058 = vrot.lane.b32.xlu0 %v1285, 32
        %v2059 = vpop.permute.xlu0 %2058
        %2060 = vrot.lane.b32.xlu0 %v1286, 32
        %v2061 = vpop.permute.xlu0 %2060
        %2062 = vrot.lane.b32.xlu0 %v1287, 32
        %v2063 = vpop.permute.xlu0 %2062
        %2064 = vrot.lane.b32.xlu0 %v1288, 32
        %v2065 = vpop.permute.xlu0 %2064
        %2066 = vrot.lane.b32.xlu0 %v1289, 32
        %v2067 = vpop.permute.xlu0 %2066
        %2068 = vrot.lane.b32.xlu0 %v1290, 32
        %v2069 = vpop.permute.xlu0 %2068
        %2070 = vrot.lane.b32.xlu0 %v1291, 32
        %v2071 = vpop.permute.xlu0 %2070
        %2072 = vrot.lane.b32.xlu0 %v1292, 32
        %v2073 = vpop.permute.xlu0 %2072
        %2106 = vrot.lane.b32.xlu0 %v2010, 64
        %v2107 = vpop.permute.xlu0 %2106
        %2108 = vrot.lane.b32.xlu0 %v2011, 64
        %v2109 = vpop.permute.xlu0 %2108
        %2110 = vrot.lane.b32.xlu0 %v2012, 64
        %v2111 = vpop.permute.xlu0 %2110
        %2112 = vrot.lane.b32.xlu0 %v2013, 64
        %v2113 = vpop.permute.xlu0 %2112
        %2114 = vrot.lane.b32.xlu0 %v2014, 64
        %v2115 = vpop.permute.xlu0 %2114
        %2116 = vrot.lane.b32.xlu0 %v2015, 64
        %v2117 = vpop.permute.xlu0 %2116
        %2118 = vrot.lane.b32.xlu0 %v2016, 64
        %v2119 = vpop.permute.xlu0 %2118
        %2120 = vrot.lane.b32.xlu0 %v2017, 64
        %v2121 = vpop.permute.xlu0 %2120
        %2122 = vrot.lane.b32.xlu0 %v2018, 64
        %v2123 = vpop.permute.xlu0 %2122
        %2124 = vrot.lane.b32.xlu0 %v2019, 64
        %v2125 = vpop.permute.xlu0 %2124
        %2126 = vrot.lane.b32.xlu0 %v2020, 64
        %v2127 = vpop.permute.xlu0 %2126
        %2128 = vrot.lane.b32.xlu0 %v2021, 64
        %v2129 = vpop.permute.xlu0 %2128
        %2130 = vrot.lane.b32.xlu0 %v2022, 64
        %v2131 = vpop.permute.xlu0 %2130
        %2132 = vrot.lane.b32.xlu0 %v2023, 64
        %v2133 = vpop.permute.xlu0 %2132
        %2134 = vrot.lane.b32.xlu0 %v2024, 64
        %v2135 = vpop.permute.xlu0 %2134
        %2136 = vrot.lane.b32.xlu0 %v2025, 64
        %v2137 = vpop.permute.xlu0 %2136
        %vm2154 = vcmask 261120
        %v2155 = vsel %vm2154, %v716, %v2043
        %v2156 = vsel %vm2154, %v717, %v2045
        %v2157 = vsel %vm2154, %v718, %v2047
        %v2158 = vsel %vm2154, %v719, %v2049
        %v2159 = vsel %vm2154, %v720, %v2051
        %v2160 = vsel %vm2154, %v721, %v2053
        %v2161 = vsel %vm2154, %v722, %v2055
        %v2162 = vsel %vm2154, %v723, %v2057
        %v2163 = vsel %vm2154, %v724, %v2059
        %v2164 = vsel %vm2154, %v725, %v2061
        %v2165 = vsel %vm2154, %v726, %v2063
        %v2166 = vsel %vm2154, %v727, %v2065
        %v2167 = vsel %vm2154, %v728, %v2067
        %v2168 = vsel %vm2154, %v729, %v2069
        %v2169 = vsel %vm2154, %v730, %v2071
        %v2170 = vsel %vm2154, %v731, %v2073
        %vm2171 = vcmask 523264
        %v2172 = vsel %vm2171, %v2155, %v2107
        %v2173 = vsel %vm2171, %v2156, %v2109
        %v2174 = vsel %vm2171, %v2157, %v2111
        %v2175 = vsel %vm2171, %v2158, %v2113
        %v2176 = vsel %vm2171, %v2159, %v2115
        %v2177 = vsel %vm2171, %v2160, %v2117
        %v2178 = vsel %vm2171, %v2161, %v2119
        %v2179 = vsel %vm2171, %v2162, %v2121
        %v2180 = vsel %vm2171, %v2163, %v2123
        %v2181 = vsel %vm2171, %v2164, %v2125
        %v2182 = vsel %vm2171, %v2165, %v2127
        %v2183 = vsel %vm2171, %v2166, %v2129
        %v2184 = vsel %vm2171, %v2167, %v2131
        %v2185 = vsel %vm2171, %v2168, %v2133
        %v2186 = vsel %vm2171, %v2169, %v2135
        %v2187 = vsel %vm2171, %v2170, %v2137
        %2188 = vst [vmem:[%s271] sm:$0xff] %v2172
        %2189 = vst [vmem:[%s271 + $0x8] sm:$0xff] %v2173
        %2190 = vst [vmem:[%s271 + $0x10] sm:$0xff] %v2174
        %2191 = vst [vmem:[%s271 + $0x18] sm:$0xff] %v2175
        %2192 = vst [vmem:[%s271 + $0x20] sm:$0xff] %v2176
        %2193 = vst [vmem:[%s271 + $0x28] sm:$0xff] %v2177
        %2194 = vst [vmem:[%s271 + $0x30] sm:$0xff] %v2178
        %2195 = vst [vmem:[%s271 + $0x38] sm:$0xff] %v2179
        %2196 = vst [vmem:[%s271 + $0x40] sm:$0xff] %v2180
        %2197 = vst [vmem:[%s271 + $0x48] sm:$0xff] %v2181
        %2198 = vst [vmem:[%s271 + $0x50] sm:$0xff] %v2182
        %2199 = vst [vmem:[%s271 + $0x58] sm:$0xff] %v2183
        %2200 = vst [vmem:[%s271 + $0x60] sm:$0xff] %v2184
        %2201 = vst [vmem:[%s271 + $0x68] sm:$0xff] %v2185
        %2202 = vst [vmem:[%s271 + $0x70] sm:$0xff] %v2186
        %2203 = vst [vmem:[%s271 + $0x78] sm:$0xff] %v2187
        %s2204 = sand.u32 %s181, 1
        %s2205 = scalar_lea.sflag [#allocation3], %s2204
        %s2206 = sand.u32 %s181, 1
        %s2207 = smul.addr %s2206, 128
        %s2208 = scalar_lea.vmem [#allocation2], %s2207
        // Predicated region
        $region49: #{tpu_custom_call.1} parent=47 // pred_check
          %p2209 = pneg %p191
        $region50: #{tpu_custom_call.1} parent=47 // pred_check_branch
          %2211 = sbr.rel (%p2209) target = $region52
        $region51: #{tpu_custom_call.1} parent=47 // pred_region
          %2213 = vsyncadd %s2205, 0
          %s2214 = smul.addr %s21, 16
          %s2215 = smul.addr %s2214, 8
          %s2216 = scalar_lea.hbm %s7, %s2215
          %s2217 = sshll.u32 %s2208, 4
          %s2218 = int_to_ptr.vmem [resolvable:$true] %s2217
          %s2219 = sshll.u32 %s2216, 4
          %s2220 = int_to_ptr.hbm [resolvable:$true] %s2219
          %2225 = dma.vmem_to_hbm [thread:$0]  %s2218, 2048, %s2220, %s2205, 128, 128, 8
        $region52: #{tpu_custom_call.1} parent=47 // pred_fallthru
          _
      $region48: #{tpu_custom_call.1} parent=5 // pred_fallthru
        _
      %p2226 = scmp.le.s32.totalorder 2, %s16
      // Predicated region
      $region53: #{tpu_custom_call.1} parent=5 // pred_check
        %p2227 = pneg %p2226
      $region54: #{tpu_custom_call.1} parent=5 // pred_check_branch
        %2229 = sbr.rel (%p2227) target = $region56
      $region55: #{tpu_custom_call.1} parent=5 // pred_region
        %s2230 = ssub.s32 %s16, 2
        // Predicated region
        $region57: #{tpu_custom_call.1} parent=55 // pred_check
          %p2231 = pneg %p197
        $region58: #{tpu_custom_call.1} parent=55 // pred_check_branch
          %2233 = sbr.rel (%p2231) target = $region60
        $region59: #{tpu_custom_call.1} parent=55 // pred_region
          %s2234 = sand.u32 %s182, 1
          %s2235 = scalar_lea.sflag [#allocation3], %s2234
          %s2236 = sand.u32 %s182, 1
          %s2237 = smul.addr %s2236, 128
          %s2238 = scalar_lea.vmem [#allocation2], %s2237
          %2240 = dma.done %s2235, 2048
        $region60: #{tpu_custom_call.1} parent=55 // pred_fallthru
          _
      $region56: #{tpu_custom_call.1} parent=5 // pred_fallthru
        _
    $region6: #{tpu_custom_call.1} parent=1 // loop_footer
      %s20 = sadd.s32 1, %s16
    $region7: #{tpu_custom_call.1} parent=1 // loop_footer_branch
      %15 = sbr.rel target = $region3
    $region8: #{tpu_custom_call.1} parent=1 // loop_exit
      _
    %2241 = vsyncpa [#allocation3], 1
    %s2242 = scalar_lea.sflag [#allocation3], 1
    %2243 = vsyncpa %s2242, 1

</llo_original>
